<compile_context>
chip_gen: v6e
topology: v6e:2x2x1
jax: 0.10.0
libtpu: 0.0.40
codegen_flags: <defaults>
</compile_context>

<pallas_src>
import functools

import jax
import jax.numpy as jnp
from jax.experimental import pallas as pl
from jax.experimental.pallas import tpu as pltpu


def _lstm_kernel(ids_ref, emb_hbm, wih_ref, whh_ref, b_ref, wout_ref, bout_ref,
                 h0_ref, c0_ref,
                 logp_ref, hn_ref, cn_ref,
                 x_sc, sem):
    S, E = x_sc.shape
    H = hn_ref.shape[1]

    # ---- fused embedding gather: per-row DMA HBM table -> VMEM (ids from SMEM) ----
    for s in range(S):
        pltpu.make_async_copy(emb_hbm.at[pl.ds(ids_ref[s], 1), :],
                              x_sc.at[pl.ds(s, 1), :],
                              sem.at[s]).start()
    for s in range(S):
        pltpu.make_async_copy(emb_hbm.at[pl.ds(ids_ref[s], 1), :],
                              x_sc.at[pl.ds(s, 1), :],
                              sem.at[s]).wait()

    # ---- input projection for ALL timesteps at once: one (S,E)@(E,4H) matmul ----
    xW = (jnp.dot(x_sc[...], wih_ref[...], preferred_element_type=jnp.float32)
          + b_ref[...])                                           # (S, 4H)

    whh = whh_ref[...]                                            # (H, 4H), read once

    # ---- recurrence: h/c carried as values (vregs), loop fully unrolled ----
    h = h0_ref[...]                                               # (1, H)
    c = c0_ref[...]                                               # (1, H)
    for t in range(S):
        gates = xW[t:t + 1, :] + jnp.dot(h, whh,
                                         preferred_element_type=jnp.float32)  # (1, 4H)
        sig = jax.nn.sigmoid(gates)      # one full-width EUP launch
        tnh = jnp.tanh(gates)            # one full-width EUP launch
        i_g = sig[:, 0 * H:1 * H]
        f_g = sig[:, 1 * H:2 * H]
        g_g = tnh[:, 2 * H:3 * H]
        o_g = sig[:, 3 * H:4 * H]
        c = f_g * c + i_g * g_g
        h = o_g * jnp.tanh(c)

    # ---- final linear + log_softmax(dim=1) ----
    logits = (jnp.dot(h, wout_ref[...], preferred_element_type=jnp.float32)
              + bout_ref[...])                                    # (1, 2)
    z = logits - jnp.max(logits, axis=1, keepdims=True)
    logp_ref[...] = z - jnp.log(jnp.sum(jnp.exp(z), axis=1, keepdims=True))

    hn_ref[...] = h
    cn_ref[...] = c


@jax.jit
def lstm_model_forward(inputs, hidden, params):
    """
    inputs: int32 token ids, shape (S,)
    hidden: (h0, c0) each shape (1, 1, H)  (PyTorch convention)
    params: dict with embedding / lstm / linear weights (PyTorch shapes)
    returns: (log_probs (1, 2), (h_n (1,1,H), c_n (1,1,H)))
    """
    h0, c0 = hidden
    H = params["weight_hh"].shape[1]
    E = params["weight_ih"].shape[1]
    S = inputs.shape[0]

    ids = inputs.astype(jnp.int32)                               # -> SMEM
    emb = params["embedding"].astype(jnp.float32)                # stays in HBM

    # Pre-transpose weights to (in, out) so the kernel does row-vector @ weight matmuls.
    wih_t = params["weight_ih"].T.astype(jnp.float32)            # (E, 4H)
    whh_t = params["weight_hh"].T.astype(jnp.float32)            # (H, 4H)
    b = (params["bias_ih"] + params["bias_hh"]).reshape(1, 4 * H).astype(jnp.float32)
    wout_t = params["weight_out"].T.astype(jnp.float32)          # (H, 2)
    bout = params["bias_out"].reshape(1, 2).astype(jnp.float32)

    h0_2d = h0.reshape(1, H).astype(jnp.float32)
    c0_2d = c0.reshape(1, H).astype(jnp.float32)

    smem_spec = pl.BlockSpec(memory_space=pltpu.MemorySpace.SMEM)
    any_spec = pl.BlockSpec(memory_space=pl.ANY)
    vmem_spec = pl.BlockSpec(memory_space=pltpu.MemorySpace.VMEM)

    logp, h_n, c_n = pl.pallas_call(
        _lstm_kernel,
        out_shape=(
            jax.ShapeDtypeStruct((1, 2), jnp.float32),
            jax.ShapeDtypeStruct((1, H), jnp.float32),
            jax.ShapeDtypeStruct((1, H), jnp.float32),
        ),
        in_specs=[smem_spec, any_spec] + [vmem_spec] * 7,
        out_specs=(vmem_spec, vmem_spec, vmem_spec),
        scratch_shapes=[
            pltpu.VMEM((S, E), jnp.float32),        # gathered embeddings
            pltpu.SemaphoreType.DMA((S,)),          # one sem per gather row
        ],
    )(ids, emb, wih_t, whh_t, b, wout_t, bout, h0_2d, c0_2d)

    return logp, (h_n.reshape(1, 1, H), c_n.reshape(1, 1, H))


def init_params(key, embedding_dim, hidden_dim, vocab_limit=100):
    E, H = embedding_dim, hidden_dim
    ks = jax.random.split(key, 7)
    scale = 1.0 / jnp.sqrt(H)
    return {
        "embedding":  jax.random.normal(ks[0], (vocab_limit + 1, E), jnp.float32),
        "weight_ih":  jax.random.uniform(ks[1], (4 * H, E), jnp.float32, -scale, scale),
        "weight_hh":  jax.random.uniform(ks[2], (4 * H, H), jnp.float32, -scale, scale),
        "bias_ih":    jax.random.uniform(ks[3], (4 * H,), jnp.float32, -scale, scale),
        "bias_hh":    jax.random.uniform(ks[4], (4 * H,), jnp.float32, -scale, scale),
        "weight_out": jax.random.uniform(ks[5], (2, H), jnp.float32, -scale, scale),
        "bias_out":   jax.random.uniform(ks[6], (2,), jnp.float32, -scale, scale),
    }


if __name__ == "__main__":
    EMBEDDING_DIM = 32
    HIDDEN_DIM = 32
    SEQ_LEN = 8

    key = jax.random.PRNGKey(0)
    k_params, k_inputs = jax.random.split(key)

    params = init_params(k_params, EMBEDDING_DIM, HIDDEN_DIM)
    inputs = jax.random.randint(k_inputs, (SEQ_LEN,), 0, 101, dtype=jnp.int32)

    # init_hidden(): zeros of shape (1, 1, hidden_dim)
    hidden = (jnp.zeros((1, 1, HIDDEN_DIM), jnp.float32),
              jnp.zeros((1, 1, HIDDEN_DIM), jnp.float32))

    logp, (h_n, c_n) = lstm_model_forward(inputs, hidden, params)
    jax.block_until_ready((logp, h_n, c_n))

    assert logp.shape == (1, 2)
    assert h_n.shape == (1, 1, HIDDEN_DIM) and c_n.shape == (1, 1, HIDDEN_DIM)
    print("KERNEL_OK")
</pallas_src>

<mosaic_0001>
module attributes {stable_mosaic.version = 11 : i64} {
  func.func @_lstm_kernel(%arg0: memref<8xi32, #tpu.memory_space<smem>>, %arg1: memref<101x32xf32, #tpu.memory_space<any>>, %arg2: memref<32x128xf32, #tpu.memory_space<vmem>>, %arg3: memref<32x128xf32, #tpu.memory_space<vmem>>, %arg4: memref<1x128xf32, #tpu.memory_space<vmem>>, %arg5: memref<32x2xf32, #tpu.memory_space<vmem>>, %arg6: memref<1x2xf32, #tpu.memory_space<vmem>>, %arg7: memref<1x32xf32, #tpu.memory_space<vmem>>, %arg8: memref<1x32xf32, #tpu.memory_space<vmem>>, %arg9: memref<1x2xf32, #tpu.memory_space<vmem>>, %arg10: memref<1x32xf32, #tpu.memory_space<vmem>>, %arg11: memref<1x32xf32, #tpu.memory_space<vmem>>, %arg12: memref<8x32xf32, #tpu.memory_space<vmem>>, %arg13: memref<8x!tpu.dma_semaphore, #tpu.memory_space<semaphore_mem>>) attributes {dimension_semantics = [], scalar_prefetch = 0 : i64, scratch_operands = 2 : i64, tpu.core_type = #tpu.core_type<tc>} {
    %c0 = arith.constant 0 : index
    %0 = memref.load %arg0[%c0] : memref<8xi32, #tpu.memory_space<smem>>
    %c0_i32 = arith.constant 0 : i32
    %c0_i32_0 = arith.constant 0 : i32
    %1 = tpu.memref_slice %arg1[%0, %c0_i32_0] : memref<101x32xf32, #tpu.memory_space<any>> -> memref<1x32xf32, #tpu.memory_space<any>>
    %c0_i32_1 = arith.constant 0 : i32
    %c0_i32_2 = arith.constant 0 : i32
    %2 = tpu.memref_slice %arg12[%c0_i32_1, %c0_i32_2] : memref<8x32xf32, #tpu.memory_space<vmem>> -> memref<1x32xf32, #tpu.memory_space<vmem>>
    %3 = tpu.memref_slice %arg13[%c0_i32] : memref<8x!tpu.dma_semaphore, #tpu.memory_space<semaphore_mem>> -> memref<1x!tpu.dma_semaphore, #tpu.memory_space<semaphore_mem>>
    %4 = tpu.memref_squeeze %3 : memref<1x!tpu.dma_semaphore, #tpu.memory_space<semaphore_mem>> -> memref<!tpu.dma_semaphore, #tpu.memory_space<semaphore_mem>>
    tpu.enqueue_dma source(%1 : memref<1x32xf32, #tpu.memory_space<any>>) target(%2 : memref<1x32xf32, #tpu.memory_space<vmem>>) target_semaphore(%4 : memref<!tpu.dma_semaphore, #tpu.memory_space<semaphore_mem>>)
    %c1 = arith.constant 1 : index
    %5 = memref.load %arg0[%c1] : memref<8xi32, #tpu.memory_space<smem>>
    %c1_i32 = arith.constant 1 : i32
    %c0_i32_3 = arith.constant 0 : i32
    %6 = tpu.memref_slice %arg1[%5, %c0_i32_3] : memref<101x32xf32, #tpu.memory_space<any>> -> memref<1x32xf32, #tpu.memory_space<any>>
    %c1_i32_4 = arith.constant 1 : i32
    %c0_i32_5 = arith.constant 0 : i32
    %7 = tpu.memref_slice %arg12[%c1_i32_4, %c0_i32_5] : memref<8x32xf32, #tpu.memory_space<vmem>> -> memref<1x32xf32, #tpu.memory_space<vmem>>
    %8 = tpu.memref_slice %arg13[%c1_i32] : memref<8x!tpu.dma_semaphore, #tpu.memory_space<semaphore_mem>> -> memref<1x!tpu.dma_semaphore, #tpu.memory_space<semaphore_mem>>
    %9 = tpu.memref_squeeze %8 : memref<1x!tpu.dma_semaphore, #tpu.memory_space<semaphore_mem>> -> memref<!tpu.dma_semaphore, #tpu.memory_space<semaphore_mem>>
    tpu.enqueue_dma source(%6 : memref<1x32xf32, #tpu.memory_space<any>>) target(%7 : memref<1x32xf32, #tpu.memory_space<vmem>>) target_semaphore(%9 : memref<!tpu.dma_semaphore, #tpu.memory_space<semaphore_mem>>)
    %c2 = arith.constant 2 : index
    %10 = memref.load %arg0[%c2] : memref<8xi32, #tpu.memory_space<smem>>
    %c2_i32 = arith.constant 2 : i32
    %c0_i32_6 = arith.constant 0 : i32
    %11 = tpu.memref_slice %arg1[%10, %c0_i32_6] : memref<101x32xf32, #tpu.memory_space<any>> -> memref<1x32xf32, #tpu.memory_space<any>>
    %c2_i32_7 = arith.constant 2 : i32
    %c0_i32_8 = arith.constant 0 : i32
    %12 = tpu.memref_slice %arg12[%c2_i32_7, %c0_i32_8] : memref<8x32xf32, #tpu.memory_space<vmem>> -> memref<1x32xf32, #tpu.memory_space<vmem>>
    %13 = tpu.memref_slice %arg13[%c2_i32] : memref<8x!tpu.dma_semaphore, #tpu.memory_space<semaphore_mem>> -> memref<1x!tpu.dma_semaphore, #tpu.memory_space<semaphore_mem>>
    %14 = tpu.memref_squeeze %13 : memref<1x!tpu.dma_semaphore, #tpu.memory_space<semaphore_mem>> -> memref<!tpu.dma_semaphore, #tpu.memory_space<semaphore_mem>>
    tpu.enqueue_dma source(%11 : memref<1x32xf32, #tpu.memory_space<any>>) target(%12 : memref<1x32xf32, #tpu.memory_space<vmem>>) target_semaphore(%14 : memref<!tpu.dma_semaphore, #tpu.memory_space<semaphore_mem>>)
    %c3 = arith.constant 3 : index
    %15 = memref.load %arg0[%c3] : memref<8xi32, #tpu.memory_space<smem>>
    %c3_i32 = arith.constant 3 : i32
    %c0_i32_9 = arith.constant 0 : i32
    %16 = tpu.memref_slice %arg1[%15, %c0_i32_9] : memref<101x32xf32, #tpu.memory_space<any>> -> memref<1x32xf32, #tpu.memory_space<any>>
    %c3_i32_10 = arith.constant 3 : i32
    %c0_i32_11 = arith.constant 0 : i32
    %17 = tpu.memref_slice %arg12[%c3_i32_10, %c0_i32_11] : memref<8x32xf32, #tpu.memory_space<vmem>> -> memref<1x32xf32, #tpu.memory_space<vmem>>
    %18 = tpu.memref_slice %arg13[%c3_i32] : memref<8x!tpu.dma_semaphore, #tpu.memory_space<semaphore_mem>> -> memref<1x!tpu.dma_semaphore, #tpu.memory_space<semaphore_mem>>
    %19 = tpu.memref_squeeze %18 : memref<1x!tpu.dma_semaphore, #tpu.memory_space<semaphore_mem>> -> memref<!tpu.dma_semaphore, #tpu.memory_space<semaphore_mem>>
    tpu.enqueue_dma source(%16 : memref<1x32xf32, #tpu.memory_space<any>>) target(%17 : memref<1x32xf32, #tpu.memory_space<vmem>>) target_semaphore(%19 : memref<!tpu.dma_semaphore, #tpu.memory_space<semaphore_mem>>)
    %c4 = arith.constant 4 : index
    %20 = memref.load %arg0[%c4] : memref<8xi32, #tpu.memory_space<smem>>
    %c4_i32 = arith.constant 4 : i32
    %c0_i32_12 = arith.constant 0 : i32
    %21 = tpu.memref_slice %arg1[%20, %c0_i32_12] : memref<101x32xf32, #tpu.memory_space<any>> -> memref<1x32xf32, #tpu.memory_space<any>>
    %c4_i32_13 = arith.constant 4 : i32
    %c0_i32_14 = arith.constant 0 : i32
    %22 = tpu.memref_slice %arg12[%c4_i32_13, %c0_i32_14] : memref<8x32xf32, #tpu.memory_space<vmem>> -> memref<1x32xf32, #tpu.memory_space<vmem>>
    %23 = tpu.memref_slice %arg13[%c4_i32] : memref<8x!tpu.dma_semaphore, #tpu.memory_space<semaphore_mem>> -> memref<1x!tpu.dma_semaphore, #tpu.memory_space<semaphore_mem>>
    %24 = tpu.memref_squeeze %23 : memref<1x!tpu.dma_semaphore, #tpu.memory_space<semaphore_mem>> -> memref<!tpu.dma_semaphore, #tpu.memory_space<semaphore_mem>>
    tpu.enqueue_dma source(%21 : memref<1x32xf32, #tpu.memory_space<any>>) target(%22 : memref<1x32xf32, #tpu.memory_space<vmem>>) target_semaphore(%24 : memref<!tpu.dma_semaphore, #tpu.memory_space<semaphore_mem>>)
    %c5 = arith.constant 5 : index
    %25 = memref.load %arg0[%c5] : memref<8xi32, #tpu.memory_space<smem>>
    %c5_i32 = arith.constant 5 : i32
    %c0_i32_15 = arith.constant 0 : i32
    %26 = tpu.memref_slice %arg1[%25, %c0_i32_15] : memref<101x32xf32, #tpu.memory_space<any>> -> memref<1x32xf32, #tpu.memory_space<any>>
    %c5_i32_16 = arith.constant 5 : i32
    %c0_i32_17 = arith.constant 0 : i32
    %27 = tpu.memref_slice %arg12[%c5_i32_16, %c0_i32_17] : memref<8x32xf32, #tpu.memory_space<vmem>> -> memref<1x32xf32, #tpu.memory_space<vmem>>
    %28 = tpu.memref_slice %arg13[%c5_i32] : memref<8x!tpu.dma_semaphore, #tpu.memory_space<semaphore_mem>> -> memref<1x!tpu.dma_semaphore, #tpu.memory_space<semaphore_mem>>
    %29 = tpu.memref_squeeze %28 : memref<1x!tpu.dma_semaphore, #tpu.memory_space<semaphore_mem>> -> memref<!tpu.dma_semaphore, #tpu.memory_space<semaphore_mem>>
    tpu.enqueue_dma source(%26 : memref<1x32xf32, #tpu.memory_space<any>>) target(%27 : memref<1x32xf32, #tpu.memory_space<vmem>>) target_semaphore(%29 : memref<!tpu.dma_semaphore, #tpu.memory_space<semaphore_mem>>)
    %c6 = arith.constant 6 : index
    %30 = memref.load %arg0[%c6] : memref<8xi32, #tpu.memory_space<smem>>
    %c6_i32 = arith.constant 6 : i32
    %c0_i32_18 = arith.constant 0 : i32
    %31 = tpu.memref_slice %arg1[%30, %c0_i32_18] : memref<101x32xf32, #tpu.memory_space<any>> -> memref<1x32xf32, #tpu.memory_space<any>>
    %c6_i32_19 = arith.constant 6 : i32
    %c0_i32_20 = arith.constant 0 : i32
    %32 = tpu.memref_slice %arg12[%c6_i32_19, %c0_i32_20] : memref<8x32xf32, #tpu.memory_space<vmem>> -> memref<1x32xf32, #tpu.memory_space<vmem>>
    %33 = tpu.memref_slice %arg13[%c6_i32] : memref<8x!tpu.dma_semaphore, #tpu.memory_space<semaphore_mem>> -> memref<1x!tpu.dma_semaphore, #tpu.memory_space<semaphore_mem>>
    %34 = tpu.memref_squeeze %33 : memref<1x!tpu.dma_semaphore, #tpu.memory_space<semaphore_mem>> -> memref<!tpu.dma_semaphore, #tpu.memory_space<semaphore_mem>>
    tpu.enqueue_dma source(%31 : memref<1x32xf32, #tpu.memory_space<any>>) target(%32 : memref<1x32xf32, #tpu.memory_space<vmem>>) target_semaphore(%34 : memref<!tpu.dma_semaphore, #tpu.memory_space<semaphore_mem>>)
    %c7 = arith.constant 7 : index
    %35 = memref.load %arg0[%c7] : memref<8xi32, #tpu.memory_space<smem>>
    %c7_i32 = arith.constant 7 : i32
    %c0_i32_21 = arith.constant 0 : i32
    %36 = tpu.memref_slice %arg1[%35, %c0_i32_21] : memref<101x32xf32, #tpu.memory_space<any>> -> memref<1x32xf32, #tpu.memory_space<any>>
    %c7_i32_22 = arith.constant 7 : i32
    %c0_i32_23 = arith.constant 0 : i32
    %37 = tpu.memref_slice %arg12[%c7_i32_22, %c0_i32_23] : memref<8x32xf32, #tpu.memory_space<vmem>> -> memref<1x32xf32, #tpu.memory_space<vmem>>
    %38 = tpu.memref_slice %arg13[%c7_i32] : memref<8x!tpu.dma_semaphore, #tpu.memory_space<semaphore_mem>> -> memref<1x!tpu.dma_semaphore, #tpu.memory_space<semaphore_mem>>
    %39 = tpu.memref_squeeze %38 : memref<1x!tpu.dma_semaphore, #tpu.memory_space<semaphore_mem>> -> memref<!tpu.dma_semaphore, #tpu.memory_space<semaphore_mem>>
    tpu.enqueue_dma source(%36 : memref<1x32xf32, #tpu.memory_space<any>>) target(%37 : memref<1x32xf32, #tpu.memory_space<vmem>>) target_semaphore(%39 : memref<!tpu.dma_semaphore, #tpu.memory_space<semaphore_mem>>)
    %c0_24 = arith.constant 0 : index
    %40 = memref.load %arg0[%c0_24] : memref<8xi32, #tpu.memory_space<smem>>
    %c0_i32_25 = arith.constant 0 : i32
    %c0_i32_26 = arith.constant 0 : i32
    %41 = tpu.memref_slice %arg1[%40, %c0_i32_26] : memref<101x32xf32, #tpu.memory_space<any>> -> memref<1x32xf32, #tpu.memory_space<any>>
    %c0_i32_27 = arith.constant 0 : i32
    %c0_i32_28 = arith.constant 0 : i32
    %42 = tpu.memref_slice %arg12[%c0_i32_27, %c0_i32_28] : memref<8x32xf32, #tpu.memory_space<vmem>> -> memref<1x32xf32, #tpu.memory_space<vmem>>
    %43 = tpu.memref_slice %arg13[%c0_i32_25] : memref<8x!tpu.dma_semaphore, #tpu.memory_space<semaphore_mem>> -> memref<1x!tpu.dma_semaphore, #tpu.memory_space<semaphore_mem>>
    %44 = tpu.memref_squeeze %43 : memref<1x!tpu.dma_semaphore, #tpu.memory_space<semaphore_mem>> -> memref<!tpu.dma_semaphore, #tpu.memory_space<semaphore_mem>>
    tpu.wait_dma2 semaphore(%44 : memref<!tpu.dma_semaphore, #tpu.memory_space<semaphore_mem>>) src(%41 : memref<1x32xf32, #tpu.memory_space<any>>) dst(%42 : memref<1x32xf32, #tpu.memory_space<vmem>>)
    %c1_29 = arith.constant 1 : index
    %45 = memref.load %arg0[%c1_29] : memref<8xi32, #tpu.memory_space<smem>>
    %c1_i32_30 = arith.constant 1 : i32
    %c0_i32_31 = arith.constant 0 : i32
    %46 = tpu.memref_slice %arg1[%45, %c0_i32_31] : memref<101x32xf32, #tpu.memory_space<any>> -> memref<1x32xf32, #tpu.memory_space<any>>
    %c1_i32_32 = arith.constant 1 : i32
    %c0_i32_33 = arith.constant 0 : i32
    %47 = tpu.memref_slice %arg12[%c1_i32_32, %c0_i32_33] : memref<8x32xf32, #tpu.memory_space<vmem>> -> memref<1x32xf32, #tpu.memory_space<vmem>>
    %48 = tpu.memref_slice %arg13[%c1_i32_30] : memref<8x!tpu.dma_semaphore, #tpu.memory_space<semaphore_mem>> -> memref<1x!tpu.dma_semaphore, #tpu.memory_space<semaphore_mem>>
    %49 = tpu.memref_squeeze %48 : memref<1x!tpu.dma_semaphore, #tpu.memory_space<semaphore_mem>> -> memref<!tpu.dma_semaphore, #tpu.memory_space<semaphore_mem>>
    tpu.wait_dma2 semaphore(%49 : memref<!tpu.dma_semaphore, #tpu.memory_space<semaphore_mem>>) src(%46 : memref<1x32xf32, #tpu.memory_space<any>>) dst(%47 : memref<1x32xf32, #tpu.memory_space<vmem>>)
    %c2_34 = arith.constant 2 : index
    %50 = memref.load %arg0[%c2_34] : memref<8xi32, #tpu.memory_space<smem>>
    %c2_i32_35 = arith.constant 2 : i32
    %c0_i32_36 = arith.constant 0 : i32
    %51 = tpu.memref_slice %arg1[%50, %c0_i32_36] : memref<101x32xf32, #tpu.memory_space<any>> -> memref<1x32xf32, #tpu.memory_space<any>>
    %c2_i32_37 = arith.constant 2 : i32
    %c0_i32_38 = arith.constant 0 : i32
    %52 = tpu.memref_slice %arg12[%c2_i32_37, %c0_i32_38] : memref<8x32xf32, #tpu.memory_space<vmem>> -> memref<1x32xf32, #tpu.memory_space<vmem>>
    %53 = tpu.memref_slice %arg13[%c2_i32_35] : memref<8x!tpu.dma_semaphore, #tpu.memory_space<semaphore_mem>> -> memref<1x!tpu.dma_semaphore, #tpu.memory_space<semaphore_mem>>
    %54 = tpu.memref_squeeze %53 : memref<1x!tpu.dma_semaphore, #tpu.memory_space<semaphore_mem>> -> memref<!tpu.dma_semaphore, #tpu.memory_space<semaphore_mem>>
    tpu.wait_dma2 semaphore(%54 : memref<!tpu.dma_semaphore, #tpu.memory_space<semaphore_mem>>) src(%51 : memref<1x32xf32, #tpu.memory_space<any>>) dst(%52 : memref<1x32xf32, #tpu.memory_space<vmem>>)
    %c3_39 = arith.constant 3 : index
    %55 = memref.load %arg0[%c3_39] : memref<8xi32, #tpu.memory_space<smem>>
    %c3_i32_40 = arith.constant 3 : i32
    %c0_i32_41 = arith.constant 0 : i32
    %56 = tpu.memref_slice %arg1[%55, %c0_i32_41] : memref<101x32xf32, #tpu.memory_space<any>> -> memref<1x32xf32, #tpu.memory_space<any>>
    %c3_i32_42 = arith.constant 3 : i32
    %c0_i32_43 = arith.constant 0 : i32
    %57 = tpu.memref_slice %arg12[%c3_i32_42, %c0_i32_43] : memref<8x32xf32, #tpu.memory_space<vmem>> -> memref<1x32xf32, #tpu.memory_space<vmem>>
    %58 = tpu.memref_slice %arg13[%c3_i32_40] : memref<8x!tpu.dma_semaphore, #tpu.memory_space<semaphore_mem>> -> memref<1x!tpu.dma_semaphore, #tpu.memory_space<semaphore_mem>>
    %59 = tpu.memref_squeeze %58 : memref<1x!tpu.dma_semaphore, #tpu.memory_space<semaphore_mem>> -> memref<!tpu.dma_semaphore, #tpu.memory_space<semaphore_mem>>
    tpu.wait_dma2 semaphore(%59 : memref<!tpu.dma_semaphore, #tpu.memory_space<semaphore_mem>>) src(%56 : memref<1x32xf32, #tpu.memory_space<any>>) dst(%57 : memref<1x32xf32, #tpu.memory_space<vmem>>)
    %c4_44 = arith.constant 4 : index
    %60 = memref.load %arg0[%c4_44] : memref<8xi32, #tpu.memory_space<smem>>
    %c4_i32_45 = arith.constant 4 : i32
    %c0_i32_46 = arith.constant 0 : i32
    %61 = tpu.memref_slice %arg1[%60, %c0_i32_46] : memref<101x32xf32, #tpu.memory_space<any>> -> memref<1x32xf32, #tpu.memory_space<any>>
    %c4_i32_47 = arith.constant 4 : i32
    %c0_i32_48 = arith.constant 0 : i32
    %62 = tpu.memref_slice %arg12[%c4_i32_47, %c0_i32_48] : memref<8x32xf32, #tpu.memory_space<vmem>> -> memref<1x32xf32, #tpu.memory_space<vmem>>
    %63 = tpu.memref_slice %arg13[%c4_i32_45] : memref<8x!tpu.dma_semaphore, #tpu.memory_space<semaphore_mem>> -> memref<1x!tpu.dma_semaphore, #tpu.memory_space<semaphore_mem>>
    %64 = tpu.memref_squeeze %63 : memref<1x!tpu.dma_semaphore, #tpu.memory_space<semaphore_mem>> -> memref<!tpu.dma_semaphore, #tpu.memory_space<semaphore_mem>>
    tpu.wait_dma2 semaphore(%64 : memref<!tpu.dma_semaphore, #tpu.memory_space<semaphore_mem>>) src(%61 : memref<1x32xf32, #tpu.memory_space<any>>) dst(%62 : memref<1x32xf32, #tpu.memory_space<vmem>>)
    %c5_49 = arith.constant 5 : index
    %65 = memref.load %arg0[%c5_49] : memref<8xi32, #tpu.memory_space<smem>>
    %c5_i32_50 = arith.constant 5 : i32
    %c0_i32_51 = arith.constant 0 : i32
    %66 = tpu.memref_slice %arg1[%65, %c0_i32_51] : memref<101x32xf32, #tpu.memory_space<any>> -> memref<1x32xf32, #tpu.memory_space<any>>
    %c5_i32_52 = arith.constant 5 : i32
    %c0_i32_53 = arith.constant 0 : i32
    %67 = tpu.memref_slice %arg12[%c5_i32_52, %c0_i32_53] : memref<8x32xf32, #tpu.memory_space<vmem>> -> memref<1x32xf32, #tpu.memory_space<vmem>>
    %68 = tpu.memref_slice %arg13[%c5_i32_50] : memref<8x!tpu.dma_semaphore, #tpu.memory_space<semaphore_mem>> -> memref<1x!tpu.dma_semaphore, #tpu.memory_space<semaphore_mem>>
    %69 = tpu.memref_squeeze %68 : memref<1x!tpu.dma_semaphore, #tpu.memory_space<semaphore_mem>> -> memref<!tpu.dma_semaphore, #tpu.memory_space<semaphore_mem>>
    tpu.wait_dma2 semaphore(%69 : memref<!tpu.dma_semaphore, #tpu.memory_space<semaphore_mem>>) src(%66 : memref<1x32xf32, #tpu.memory_space<any>>) dst(%67 : memref<1x32xf32, #tpu.memory_space<vmem>>)
    %c6_54 = arith.constant 6 : index
    %70 = memref.load %arg0[%c6_54] : memref<8xi32, #tpu.memory_space<smem>>
    %c6_i32_55 = arith.constant 6 : i32
    %c0_i32_56 = arith.constant 0 : i32
    %71 = tpu.memref_slice %arg1[%70, %c0_i32_56] : memref<101x32xf32, #tpu.memory_space<any>> -> memref<1x32xf32, #tpu.memory_space<any>>
    %c6_i32_57 = arith.constant 6 : i32
    %c0_i32_58 = arith.constant 0 : i32
    %72 = tpu.memref_slice %arg12[%c6_i32_57, %c0_i32_58] : memref<8x32xf32, #tpu.memory_space<vmem>> -> memref<1x32xf32, #tpu.memory_space<vmem>>
    %73 = tpu.memref_slice %arg13[%c6_i32_55] : memref<8x!tpu.dma_semaphore, #tpu.memory_space<semaphore_mem>> -> memref<1x!tpu.dma_semaphore, #tpu.memory_space<semaphore_mem>>
    %74 = tpu.memref_squeeze %73 : memref<1x!tpu.dma_semaphore, #tpu.memory_space<semaphore_mem>> -> memref<!tpu.dma_semaphore, #tpu.memory_space<semaphore_mem>>
    tpu.wait_dma2 semaphore(%74 : memref<!tpu.dma_semaphore, #tpu.memory_space<semaphore_mem>>) src(%71 : memref<1x32xf32, #tpu.memory_space<any>>) dst(%72 : memref<1x32xf32, #tpu.memory_space<vmem>>)
    %c7_59 = arith.constant 7 : index
    %75 = memref.load %arg0[%c7_59] : memref<8xi32, #tpu.memory_space<smem>>
    %c7_i32_60 = arith.constant 7 : i32
    %c0_i32_61 = arith.constant 0 : i32
    %76 = tpu.memref_slice %arg1[%75, %c0_i32_61] : memref<101x32xf32, #tpu.memory_space<any>> -> memref<1x32xf32, #tpu.memory_space<any>>
    %c7_i32_62 = arith.constant 7 : i32
    %c0_i32_63 = arith.constant 0 : i32
    %77 = tpu.memref_slice %arg12[%c7_i32_62, %c0_i32_63] : memref<8x32xf32, #tpu.memory_space<vmem>> -> memref<1x32xf32, #tpu.memory_space<vmem>>
    %78 = tpu.memref_slice %arg13[%c7_i32_60] : memref<8x!tpu.dma_semaphore, #tpu.memory_space<semaphore_mem>> -> memref<1x!tpu.dma_semaphore, #tpu.memory_space<semaphore_mem>>
    %79 = tpu.memref_squeeze %78 : memref<1x!tpu.dma_semaphore, #tpu.memory_space<semaphore_mem>> -> memref<!tpu.dma_semaphore, #tpu.memory_space<semaphore_mem>>
    tpu.wait_dma2 semaphore(%79 : memref<!tpu.dma_semaphore, #tpu.memory_space<semaphore_mem>>) src(%76 : memref<1x32xf32, #tpu.memory_space<any>>) dst(%77 : memref<1x32xf32, #tpu.memory_space<vmem>>)
    %c0_64 = arith.constant 0 : index
    %c0_65 = arith.constant 0 : index
    %80 = vector.load %arg12[%c0_64, %c0_65] : memref<8x32xf32, #tpu.memory_space<vmem>>, vector<8x32xf32>
    %c0_66 = arith.constant 0 : index
    %c0_67 = arith.constant 0 : index
    %81 = vector.load %arg2[%c0_66, %c0_67] : memref<32x128xf32, #tpu.memory_space<vmem>>, vector<32x128xf32>
    %cst = arith.constant dense<0.000000e+00> : vector<8x128xf32>
    %82 = tpu.matmul %80, %81, %cst {dimension_numbers = #tpu.dot_dimension_numbers<[1], [0], [0], [1], [0, 0, 1, 1], [], []>} : vector<8x32xf32>, vector<32x128xf32>, vector<8x128xf32> -> vector<8x128xf32>
    %c0_68 = arith.constant 0 : index
    %c0_69 = arith.constant 0 : index
    %83 = vector.load %arg4[%c0_68, %c0_69] : memref<1x128xf32, #tpu.memory_space<vmem>>, vector<1x128xf32>
    %84 = vector.broadcast %83 : vector<1x128xf32> to vector<8x128xf32>
    %85 = arith.addf %82, %84 : vector<8x128xf32>
    %c0_70 = arith.constant 0 : index
    %c0_71 = arith.constant 0 : index
    %86 = vector.load %arg3[%c0_70, %c0_71] : memref<32x128xf32, #tpu.memory_space<vmem>>, vector<32x128xf32>
    %c0_72 = arith.constant 0 : index
    %c0_73 = arith.constant 0 : index
    %87 = vector.load %arg7[%c0_72, %c0_73] : memref<1x32xf32, #tpu.memory_space<vmem>>, vector<1x32xf32>
    %c0_74 = arith.constant 0 : index
    %c0_75 = arith.constant 0 : index
    %88 = vector.load %arg8[%c0_74, %c0_75] : memref<1x32xf32, #tpu.memory_space<vmem>>, vector<1x32xf32>
    %89 = vector.extract_strided_slice %85 {offsets = [0, 0], sizes = [1, 128], strides = [1, 1]} : vector<8x128xf32> to vector<1x128xf32>
    %cst_76 = arith.constant dense<0.000000e+00> : vector<1x128xf32>
    %90 = tpu.matmul %87, %86, %cst_76 {dimension_numbers = #tpu.dot_dimension_numbers<[1], [0], [0], [1], [0, 0, 1, 1], [], []>} : vector<1x32xf32>, vector<32x128xf32>, vector<1x128xf32> -> vector<1x128xf32>
    %91 = arith.addf %89, %90 : vector<1x128xf32>
    %92 = arith.negf %91 : vector<1x128xf32>
    %93 = math.exp %92 : vector<1x128xf32>
    %cst_77 = arith.constant 1.000000e+00 : f32
    %94 = vector.broadcast %cst_77 : f32 to vector<1x128xf32>
    %95 = arith.addf %94, %93 : vector<1x128xf32>
    %96 = arith.divf %94, %95 : vector<1x128xf32>
    %97 = math.tanh %91 : vector<1x128xf32>
    %98 = vector.extract_strided_slice %96 {offsets = [0, 0], sizes = [1, 32], strides = [1, 1]} : vector<1x128xf32> to vector<1x32xf32>
    %99 = vector.extract_strided_slice %96 {offsets = [0, 32], sizes = [1, 32], strides = [1, 1]} : vector<1x128xf32> to vector<1x32xf32>
    %100 = vector.extract_strided_slice %97 {offsets = [0, 64], sizes = [1, 32], strides = [1, 1]} : vector<1x128xf32> to vector<1x32xf32>
    %101 = vector.extract_strided_slice %96 {offsets = [0, 96], sizes = [1, 32], strides = [1, 1]} : vector<1x128xf32> to vector<1x32xf32>
    %102 = arith.mulf %99, %88 : vector<1x32xf32>
    %103 = arith.mulf %98, %100 : vector<1x32xf32>
    %104 = arith.addf %102, %103 : vector<1x32xf32>
    %105 = math.tanh %104 : vector<1x32xf32>
    %106 = arith.mulf %101, %105 : vector<1x32xf32>
    %107 = vector.extract_strided_slice %85 {offsets = [1, 0], sizes = [1, 128], strides = [1, 1]} : vector<8x128xf32> to vector<1x128xf32>
    %cst_78 = arith.constant dense<0.000000e+00> : vector<1x128xf32>
    %108 = tpu.matmul %106, %86, %cst_78 {dimension_numbers = #tpu.dot_dimension_numbers<[1], [0], [0], [1], [0, 0, 1, 1], [], []>} : vector<1x32xf32>, vector<32x128xf32>, vector<1x128xf32> -> vector<1x128xf32>
    %109 = arith.addf %107, %108 : vector<1x128xf32>
    %110 = arith.negf %109 : vector<1x128xf32>
    %111 = math.exp %110 : vector<1x128xf32>
    %cst_79 = arith.constant 1.000000e+00 : f32
    %112 = vector.broadcast %cst_79 : f32 to vector<1x128xf32>
    %113 = arith.addf %112, %111 : vector<1x128xf32>
    %114 = arith.divf %112, %113 : vector<1x128xf32>
    %115 = math.tanh %109 : vector<1x128xf32>
    %116 = vector.extract_strided_slice %114 {offsets = [0, 0], sizes = [1, 32], strides = [1, 1]} : vector<1x128xf32> to vector<1x32xf32>
    %117 = vector.extract_strided_slice %114 {offsets = [0, 32], sizes = [1, 32], strides = [1, 1]} : vector<1x128xf32> to vector<1x32xf32>
    %118 = vector.extract_strided_slice %115 {offsets = [0, 64], sizes = [1, 32], strides = [1, 1]} : vector<1x128xf32> to vector<1x32xf32>
    %119 = vector.extract_strided_slice %114 {offsets = [0, 96], sizes = [1, 32], strides = [1, 1]} : vector<1x128xf32> to vector<1x32xf32>
    %120 = arith.mulf %117, %104 : vector<1x32xf32>
    %121 = arith.mulf %116, %118 : vector<1x32xf32>
    %122 = arith.addf %120, %121 : vector<1x32xf32>
    %123 = math.tanh %122 : vector<1x32xf32>
    %124 = arith.mulf %119, %123 : vector<1x32xf32>
    %125 = vector.extract_strided_slice %85 {offsets = [2, 0], sizes = [1, 128], strides = [1, 1]} : vector<8x128xf32> to vector<1x128xf32>
    %cst_80 = arith.constant dense<0.000000e+00> : vector<1x128xf32>
    %126 = tpu.matmul %124, %86, %cst_80 {dimension_numbers = #tpu.dot_dimension_numbers<[1], [0], [0], [1], [0, 0, 1, 1], [], []>} : vector<1x32xf32>, vector<32x128xf32>, vector<1x128xf32> -> vector<1x128xf32>
    %127 = arith.addf %125, %126 : vector<1x128xf32>
    %128 = arith.negf %127 : vector<1x128xf32>
    %129 = math.exp %128 : vector<1x128xf32>
    %cst_81 = arith.constant 1.000000e+00 : f32
    %130 = vector.broadcast %cst_81 : f32 to vector<1x128xf32>
    %131 = arith.addf %130, %129 : vector<1x128xf32>
    %132 = arith.divf %130, %131 : vector<1x128xf32>
    %133 = math.tanh %127 : vector<1x128xf32>
    %134 = vector.extract_strided_slice %132 {offsets = [0, 0], sizes = [1, 32], strides = [1, 1]} : vector<1x128xf32> to vector<1x32xf32>
    %135 = vector.extract_strided_slice %132 {offsets = [0, 32], sizes = [1, 32], strides = [1, 1]} : vector<1x128xf32> to vector<1x32xf32>
    %136 = vector.extract_strided_slice %133 {offsets = [0, 64], sizes = [1, 32], strides = [1, 1]} : vector<1x128xf32> to vector<1x32xf32>
    %137 = vector.extract_strided_slice %132 {offsets = [0, 96], sizes = [1, 32], strides = [1, 1]} : vector<1x128xf32> to vector<1x32xf32>
    %138 = arith.mulf %135, %122 : vector<1x32xf32>
    %139 = arith.mulf %134, %136 : vector<1x32xf32>
    %140 = arith.addf %138, %139 : vector<1x32xf32>
    %141 = math.tanh %140 : vector<1x32xf32>
    %142 = arith.mulf %137, %141 : vector<1x32xf32>
    %143 = vector.extract_strided_slice %85 {offsets = [3, 0], sizes = [1, 128], strides = [1, 1]} : vector<8x128xf32> to vector<1x128xf32>
    %cst_82 = arith.constant dense<0.000000e+00> : vector<1x128xf32>
    %144 = tpu.matmul %142, %86, %cst_82 {dimension_numbers = #tpu.dot_dimension_numbers<[1], [0], [0], [1], [0, 0, 1, 1], [], []>} : vector<1x32xf32>, vector<32x128xf32>, vector<1x128xf32> -> vector<1x128xf32>
    %145 = arith.addf %143, %144 : vector<1x128xf32>
    %146 = arith.negf %145 : vector<1x128xf32>
    %147 = math.exp %146 : vector<1x128xf32>
    %cst_83 = arith.constant 1.000000e+00 : f32
    %148 = vector.broadcast %cst_83 : f32 to vector<1x128xf32>
    %149 = arith.addf %148, %147 : vector<1x128xf32>
    %150 = arith.divf %148, %149 : vector<1x128xf32>
    %151 = math.tanh %145 : vector<1x128xf32>
    %152 = vector.extract_strided_slice %150 {offsets = [0, 0], sizes = [1, 32], strides = [1, 1]} : vector<1x128xf32> to vector<1x32xf32>
    %153 = vector.extract_strided_slice %150 {offsets = [0, 32], sizes = [1, 32], strides = [1, 1]} : vector<1x128xf32> to vector<1x32xf32>
    %154 = vector.extract_strided_slice %151 {offsets = [0, 64], sizes = [1, 32], strides = [1, 1]} : vector<1x128xf32> to vector<1x32xf32>
    %155 = vector.extract_strided_slice %150 {offsets = [0, 96], sizes = [1, 32], strides = [1, 1]} : vector<1x128xf32> to vector<1x32xf32>
    %156 = arith.mulf %153, %140 : vector<1x32xf32>
    %157 = arith.mulf %152, %154 : vector<1x32xf32>
    %158 = arith.addf %156, %157 : vector<1x32xf32>
    %159 = math.tanh %158 : vector<1x32xf32>
    %160 = arith.mulf %155, %159 : vector<1x32xf32>
    %161 = vector.extract_strided_slice %85 {offsets = [4, 0], sizes = [1, 128], strides = [1, 1]} : vector<8x128xf32> to vector<1x128xf32>
    %cst_84 = arith.constant dense<0.000000e+00> : vector<1x128xf32>
    %162 = tpu.matmul %160, %86, %cst_84 {dimension_numbers = #tpu.dot_dimension_numbers<[1], [0], [0], [1], [0, 0, 1, 1], [], []>} : vector<1x32xf32>, vector<32x128xf32>, vector<1x128xf32> -> vector<1x128xf32>
    %163 = arith.addf %161, %162 : vector<1x128xf32>
    %164 = arith.negf %163 : vector<1x128xf32>
    %165 = math.exp %164 : vector<1x128xf32>
    %cst_85 = arith.constant 1.000000e+00 : f32
    %166 = vector.broadcast %cst_85 : f32 to vector<1x128xf32>
    %167 = arith.addf %166, %165 : vector<1x128xf32>
    %168 = arith.divf %166, %167 : vector<1x128xf32>
    %169 = math.tanh %163 : vector<1x128xf32>
    %170 = vector.extract_strided_slice %168 {offsets = [0, 0], sizes = [1, 32], strides = [1, 1]} : vector<1x128xf32> to vector<1x32xf32>
    %171 = vector.extract_strided_slice %168 {offsets = [0, 32], sizes = [1, 32], strides = [1, 1]} : vector<1x128xf32> to vector<1x32xf32>
    %172 = vector.extract_strided_slice %169 {offsets = [0, 64], sizes = [1, 32], strides = [1, 1]} : vector<1x128xf32> to vector<1x32xf32>
    %173 = vector.extract_strided_slice %168 {offsets = [0, 96], sizes = [1, 32], strides = [1, 1]} : vector<1x128xf32> to vector<1x32xf32>
    %174 = arith.mulf %171, %158 : vector<1x32xf32>
    %175 = arith.mulf %170, %172 : vector<1x32xf32>
    %176 = arith.addf %174, %175 : vector<1x32xf32>
    %177 = math.tanh %176 : vector<1x32xf32>
    %178 = arith.mulf %173, %177 : vector<1x32xf32>
    %179 = vector.extract_strided_slice %85 {offsets = [5, 0], sizes = [1, 128], strides = [1, 1]} : vector<8x128xf32> to vector<1x128xf32>
    %cst_86 = arith.constant dense<0.000000e+00> : vector<1x128xf32>
    %180 = tpu.matmul %178, %86, %cst_86 {dimension_numbers = #tpu.dot_dimension_numbers<[1], [0], [0], [1], [0, 0, 1, 1], [], []>} : vector<1x32xf32>, vector<32x128xf32>, vector<1x128xf32> -> vector<1x128xf32>
    %181 = arith.addf %179, %180 : vector<1x128xf32>
    %182 = arith.negf %181 : vector<1x128xf32>
    %183 = math.exp %182 : vector<1x128xf32>
    %cst_87 = arith.constant 1.000000e+00 : f32
    %184 = vector.broadcast %cst_87 : f32 to vector<1x128xf32>
    %185 = arith.addf %184, %183 : vector<1x128xf32>
    %186 = arith.divf %184, %185 : vector<1x128xf32>
    %187 = math.tanh %181 : vector<1x128xf32>
    %188 = vector.extract_strided_slice %186 {offsets = [0, 0], sizes = [1, 32], strides = [1, 1]} : vector<1x128xf32> to vector<1x32xf32>
    %189 = vector.extract_strided_slice %186 {offsets = [0, 32], sizes = [1, 32], strides = [1, 1]} : vector<1x128xf32> to vector<1x32xf32>
    %190 = vector.extract_strided_slice %187 {offsets = [0, 64], sizes = [1, 32], strides = [1, 1]} : vector<1x128xf32> to vector<1x32xf32>
    %191 = vector.extract_strided_slice %186 {offsets = [0, 96], sizes = [1, 32], strides = [1, 1]} : vector<1x128xf32> to vector<1x32xf32>
    %192 = arith.mulf %189, %176 : vector<1x32xf32>
    %193 = arith.mulf %188, %190 : vector<1x32xf32>
    %194 = arith.addf %192, %193 : vector<1x32xf32>
    %195 = math.tanh %194 : vector<1x32xf32>
    %196 = arith.mulf %191, %195 : vector<1x32xf32>
    %197 = vector.extract_strided_slice %85 {offsets = [6, 0], sizes = [1, 128], strides = [1, 1]} : vector<8x128xf32> to vector<1x128xf32>
    %cst_88 = arith.constant dense<0.000000e+00> : vector<1x128xf32>
    %198 = tpu.matmul %196, %86, %cst_88 {dimension_numbers = #tpu.dot_dimension_numbers<[1], [0], [0], [1], [0, 0, 1, 1], [], []>} : vector<1x32xf32>, vector<32x128xf32>, vector<1x128xf32> -> vector<1x128xf32>
    %199 = arith.addf %197, %198 : vector<1x128xf32>
    %200 = arith.negf %199 : vector<1x128xf32>
    %201 = math.exp %200 : vector<1x128xf32>
    %cst_89 = arith.constant 1.000000e+00 : f32
    %202 = vector.broadcast %cst_89 : f32 to vector<1x128xf32>
    %203 = arith.addf %202, %201 : vector<1x128xf32>
    %204 = arith.divf %202, %203 : vector<1x128xf32>
    %205 = math.tanh %199 : vector<1x128xf32>
    %206 = vector.extract_strided_slice %204 {offsets = [0, 0], sizes = [1, 32], strides = [1, 1]} : vector<1x128xf32> to vector<1x32xf32>
    %207 = vector.extract_strided_slice %204 {offsets = [0, 32], sizes = [1, 32], strides = [1, 1]} : vector<1x128xf32> to vector<1x32xf32>
    %208 = vector.extract_strided_slice %205 {offsets = [0, 64], sizes = [1, 32], strides = [1, 1]} : vector<1x128xf32> to vector<1x32xf32>
    %209 = vector.extract_strided_slice %204 {offsets = [0, 96], sizes = [1, 32], strides = [1, 1]} : vector<1x128xf32> to vector<1x32xf32>
    %210 = arith.mulf %207, %194 : vector<1x32xf32>
    %211 = arith.mulf %206, %208 : vector<1x32xf32>
    %212 = arith.addf %210, %211 : vector<1x32xf32>
    %213 = math.tanh %212 : vector<1x32xf32>
    %214 = arith.mulf %209, %213 : vector<1x32xf32>
    %215 = vector.extract_strided_slice %85 {offsets = [7, 0], sizes = [1, 128], strides = [1, 1]} : vector<8x128xf32> to vector<1x128xf32>
    %cst_90 = arith.constant dense<0.000000e+00> : vector<1x128xf32>
    %216 = tpu.matmul %214, %86, %cst_90 {dimension_numbers = #tpu.dot_dimension_numbers<[1], [0], [0], [1], [0, 0, 1, 1], [], []>} : vector<1x32xf32>, vector<32x128xf32>, vector<1x128xf32> -> vector<1x128xf32>
    %217 = arith.addf %215, %216 : vector<1x128xf32>
    %218 = arith.negf %217 : vector<1x128xf32>
    %219 = math.exp %218 : vector<1x128xf32>
    %cst_91 = arith.constant 1.000000e+00 : f32
    %220 = vector.broadcast %cst_91 : f32 to vector<1x128xf32>
    %221 = arith.addf %220, %219 : vector<1x128xf32>
    %222 = arith.divf %220, %221 : vector<1x128xf32>
    %223 = math.tanh %217 : vector<1x128xf32>
    %224 = vector.extract_strided_slice %222 {offsets = [0, 0], sizes = [1, 32], strides = [1, 1]} : vector<1x128xf32> to vector<1x32xf32>
    %225 = vector.extract_strided_slice %222 {offsets = [0, 32], sizes = [1, 32], strides = [1, 1]} : vector<1x128xf32> to vector<1x32xf32>
    %226 = vector.extract_strided_slice %223 {offsets = [0, 64], sizes = [1, 32], strides = [1, 1]} : vector<1x128xf32> to vector<1x32xf32>
    %227 = vector.extract_strided_slice %222 {offsets = [0, 96], sizes = [1, 32], strides = [1, 1]} : vector<1x128xf32> to vector<1x32xf32>
    %228 = arith.mulf %225, %212 : vector<1x32xf32>
    %229 = arith.mulf %224, %226 : vector<1x32xf32>
    %230 = arith.addf %228, %229 : vector<1x32xf32>
    %231 = math.tanh %230 : vector<1x32xf32>
    %232 = arith.mulf %227, %231 : vector<1x32xf32>
    %c0_92 = arith.constant 0 : index
    %c0_93 = arith.constant 0 : index
    %233 = vector.load %arg5[%c0_92, %c0_93] : memref<32x2xf32, #tpu.memory_space<vmem>>, vector<32x2xf32>
    %cst_94 = arith.constant dense<0.000000e+00> : vector<1x2xf32>
    %234 = tpu.matmul %232, %233, %cst_94 {dimension_numbers = #tpu.dot_dimension_numbers<[1], [0], [0], [1], [0, 0, 1, 1], [], []>} : vector<1x32xf32>, vector<32x2xf32>, vector<1x2xf32> -> vector<1x2xf32>
    %c0_95 = arith.constant 0 : index
    %c0_96 = arith.constant 0 : index
    %235 = vector.load %arg6[%c0_95, %c0_96] : memref<1x2xf32, #tpu.memory_space<vmem>>, vector<1x2xf32>
    %236 = arith.addf %234, %235 : vector<1x2xf32>
    %cst_97 = arith.constant dense<0xFF800000> : vector<1xf32>
    %237 = vector.multi_reduction <maximumf>, %236, %cst_97 [1] : vector<1x2xf32> to vector<1xf32>
    %238 = vector.shape_cast %237 : vector<1xf32> to vector<1x1xf32>
    %239 = vector.broadcast %238 : vector<1x1xf32> to vector<1x2xf32>
    %240 = arith.subf %236, %239 : vector<1x2xf32>
    %241 = math.exp %240 : vector<1x2xf32>
    %cst_98 = arith.constant dense<0.000000e+00> : vector<1xf32>
    %242 = vector.multi_reduction <add>, %241, %cst_98 [1] : vector<1x2xf32> to vector<1xf32>
    %243 = vector.shape_cast %242 : vector<1xf32> to vector<1x1xf32>
    %244 = math.log %243 : vector<1x1xf32>
    %245 = vector.broadcast %244 : vector<1x1xf32> to vector<1x2xf32>
    %246 = arith.subf %240, %245 : vector<1x2xf32>
    %c0_99 = arith.constant 0 : index
    %c0_100 = arith.constant 0 : index
    %247 = vector.load %arg9[%c0_99, %c0_100] : memref<1x2xf32, #tpu.memory_space<vmem>>, vector<1x2xf32>
    tpu.vector_store %arg9[%c0_99, %c0_100], %246 {strides = array<i32>} : memref<1x2xf32, #tpu.memory_space<vmem>>, vector<1x2xf32>,
    %c0_101 = arith.constant 0 : index
    %c0_102 = arith.constant 0 : index
    %248 = vector.load %arg10[%c0_101, %c0_102] : memref<1x32xf32, #tpu.memory_space<vmem>>, vector<1x32xf32>
    tpu.vector_store %arg10[%c0_101, %c0_102], %232 {strides = array<i32>} : memref<1x32xf32, #tpu.memory_space<vmem>>, vector<1x32xf32>,
    %c0_103 = arith.constant 0 : index
    %c0_104 = arith.constant 0 : index
    %249 = vector.load %arg11[%c0_103, %c0_104] : memref<1x32xf32, #tpu.memory_space<vmem>>, vector<1x32xf32>
    tpu.vector_store %arg11[%c0_103, %c0_104], %230 {strides = array<i32>} : memref<1x32xf32, #tpu.memory_space<vmem>>, vector<1x32xf32>,
    return
  }
}

</mosaic_0001>

<llo_original>
// kernel: lstm_model_forward.1
$region0: #{lstm_model_forward.1}
  #allocation0 [shape = 'u32[]', space=smem, size = 0x4, offset = 0x4, fixed_abs, tag = 'smem constant byte address 0x4 - core index']
  #allocation1 [shape = 'u32[144,128]{1,0:T(1,128)}', space=vmem, size = 0x12000, scoped, tag = 'internal scratch']
  #allocation2 [shape = 'f32[8,32]{1,0:T(8,128)}', space=vmem, size = 0x1000, scoped, tag = 'scratch operand']
  #allocation3 [shape = 's32[8]{0}', space=sflag, size = 0x20, scoped, tag = 'scratch operand']
  #allocation11 [shape = 's32[]', space=sflag, size = 0x4, offset = 0, fixed_abs, tag = 'sflag constant byte address 0x0 - dummy sync flag']
  #allocation12 [shape = 's32[]', space=sflag, size = 0x4, offset = 0, fixed_abs, tag = 'sflag constant byte address 0x0 - dummy sync flag']
  #allocation13 [shape = 's32[]', space=sflag, size = 0x4, offset = 0, fixed_abs, tag = 'sflag constant byte address 0x0 - dummy sync flag']
  #allocation14 [shape = 's32[]', space=sflag, size = 0x4, offset = 0, fixed_abs, tag = 'sflag constant byte address 0x0 - dummy sync flag']
  #allocation15 [shape = 's32[]', space=sflag, size = 0x4, offset = 0, fixed_abs, tag = 'sflag constant byte address 0x0 - dummy sync flag']
  #allocation16 [shape = 's32[]', space=sflag, size = 0x4, offset = 0, fixed_abs, tag = 'sflag constant byte address 0x0 - dummy sync flag']
  #allocation17 [shape = 's32[]', space=sflag, size = 0x4, offset = 0, fixed_abs, tag = 'sflag constant byte address 0x0 - dummy sync flag']
  #allocation18 [shape = 's32[]', space=sflag, size = 0x4, offset = 0, fixed_abs, tag = 'sflag constant byte address 0x0 - dummy sync flag']
  %s0 = inlined_call_operand.vmem [shape: s32[8], index: 0, kind: input, shape index: {}]
  %s1 = inlined_call_operand.vmem [shape: f32[101,32], index: 1, kind: input, shape index: {}]
  %s2 = inlined_call_operand.vmem [shape: f32[32,128], index: 2, kind: input, shape index: {}]
  %s3 = inlined_call_operand.vmem [shape: f32[32,128], index: 3, kind: input, shape index: {}]
  %s4 = inlined_call_operand.vmem [shape: f32[1,128], index: 4, kind: input, shape index: {}]
  %s5 = inlined_call_operand.vmem [shape: f32[32,2], index: 5, kind: input, shape index: {}]
  %s6 = inlined_call_operand.vmem [shape: f32[1,2], index: 6, kind: input, shape index: {}]
  %s7 = inlined_call_operand.vmem [shape: f32[1,32], index: 7, kind: input, shape index: {}]
  %s8 = inlined_call_operand.vmem [shape: f32[1,32], index: 8, kind: input, shape index: {}]
  %s9 = inlined_call_operand.hbm [shape: f32[1,2], index: 9, kind: output, shape index: {0}]
  %s10 = inlined_call_operand.hbm [shape: f32[1,32], index: 10, kind: output, shape index: {1}]
  %s11 = inlined_call_operand.hbm [shape: f32[1,32], index: 11, kind: output, shape index: {2}]
  %12 = xla_tuple %s9, %s10, %s11
  %s13 = sld [smem:[#allocation0]]
  $region302: #{lstm_model_forward.1} parent=0
    _
  %s15 = ssub.s32 1, %s13
  %s16 = scalar_select 0, %s15, %s13
  $region1: #{lstm_model_forward.1} parent=0
    #allocation4 [shape = 'u8[512]{0}', space=smem, size = 0x200, scoped, tag = 'input window, operand 0, single buffered']
    #allocation5 [shape = 's32[1]{0}', space=sflag, size = 0x4, scoped, tag = 'scoped memory for lstm_model_forward.1']
    #allocation6 [shape = 's32[1]{0}', space=sflag, size = 0x4, scoped, tag = 'scoped memory for lstm_model_forward.1']
    #allocation7 [shape = 'u8[512]{0}', space=vmem, size = 0x400, scoped, tag = 'output window, operand 0, single buffered']
    #allocation8 [shape = 'u8[512]{0}', space=vmem, size = 0x400, scoped, tag = 'output window, operand 1, single buffered']
    #allocation9 [shape = 's32[1]{0}', space=sflag, size = 0x4, scoped, tag = 'scoped memory for lstm_model_forward.1']
    #allocation10 [shape = 'u8[512]{0}', space=vmem, size = 0x400, scoped, tag = 'output window, operand 2, single buffered']
    %17 = vsyncpa [#allocation6], 0
    %18 = vsyncpa [#allocation5], 0
    %19 = vsyncpa [#allocation9], 0
    // Predicated region
    $region2: #{lstm_model_forward.1} parent=1 // pred_check
      _
    $region3: #{lstm_model_forward.1} parent=1 // pred_check_branch
      %21 = sbr.rel (0) target = $region5
    $region4: #{lstm_model_forward.1} parent=1 // pred_region
      %s23 = ssub.s32 16, 16
      %24 = vsyncadd [#allocation6], %s23
      %s26 = sshll.u32 %s0, 4
      %s27 = int_to_ptr.vmem [resolvable:$true] %s26
      %29 = dma.vmem_to_smem %s27, 16, [#allocation4], [#allocation6]
    $region5: #{lstm_model_forward.1} parent=1 // pred_fallthru
      _
    // Predicated region
    $region6: #{lstm_model_forward.1} parent=1 // pred_check
      _
    $region7: #{lstm_model_forward.1} parent=1 // pred_check_branch
      %31 = sbr.rel (0) target = $region9
    $region8: #{lstm_model_forward.1} parent=1 // pred_region
      _
    $region9: #{lstm_model_forward.1} parent=1 // pred_fallthru
      _
    // Predicated region
    $region10: #{lstm_model_forward.1} parent=1 // pred_check
      _
    $region11: #{lstm_model_forward.1} parent=1 // pred_check_branch
      %33 = sbr.rel (0) target = $region13
    $region12: #{lstm_model_forward.1} parent=1 // pred_region
      _
    $region13: #{lstm_model_forward.1} parent=1 // pred_fallthru
      _
    // Predicated region
    $region14: #{lstm_model_forward.1} parent=1 // pred_check
      _
    $region15: #{lstm_model_forward.1} parent=1 // pred_check_branch
      %35 = sbr.rel (0) target = $region17
    $region16: #{lstm_model_forward.1} parent=1 // pred_region
      _
    $region17: #{lstm_model_forward.1} parent=1 // pred_fallthru
      _
    // Predicated region
    $region18: #{lstm_model_forward.1} parent=1 // pred_check
      _
    $region19: #{lstm_model_forward.1} parent=1 // pred_check_branch
      %37 = sbr.rel (0) target = $region21
    $region20: #{lstm_model_forward.1} parent=1 // pred_region
      _
    $region21: #{lstm_model_forward.1} parent=1 // pred_fallthru
      _
    // Predicated region
    $region22: #{lstm_model_forward.1} parent=1 // pred_check
      _
    $region23: #{lstm_model_forward.1} parent=1 // pred_check_branch
      %39 = sbr.rel (0) target = $region25
    $region24: #{lstm_model_forward.1} parent=1 // pred_region
      _
    $region25: #{lstm_model_forward.1} parent=1 // pred_fallthru
      _
    // Predicated region
    $region26: #{lstm_model_forward.1} parent=1 // pred_check
      _
    $region27: #{lstm_model_forward.1} parent=1 // pred_check_branch
      %41 = sbr.rel (0) target = $region29
    $region28: #{lstm_model_forward.1} parent=1 // pred_region
      _
    $region29: #{lstm_model_forward.1} parent=1 // pred_fallthru
      _
    // Predicated region
    $region30: #{lstm_model_forward.1} parent=1 // pred_check
      _
    $region31: #{lstm_model_forward.1} parent=1 // pred_check_branch
      %43 = sbr.rel (0) target = $region33
    $region32: #{lstm_model_forward.1} parent=1 // pred_region
      _
    $region33: #{lstm_model_forward.1} parent=1 // pred_fallthru
      _
    // Predicated region
    $region34: #{lstm_model_forward.1} parent=1 // pred_check
      _
    $region35: #{lstm_model_forward.1} parent=1 // pred_check_branch
      %45 = sbr.rel (0) target = $region37
    $region36: #{lstm_model_forward.1} parent=1 // pred_region
      %46 = dma.done [#allocation6], 16
    $region37: #{lstm_model_forward.1} parent=1 // pred_fallthru
      _
    %47 = sfence
    %s48 = sld [smem:[#allocation4]]
    %s49 = scalar_lea.vmem %s1, %s48
    %p51 = scmp.lt.u32.totalorder 1, 8
    %p52 = pneg %p51
    // Predicated region
    $region38: #{lstm_model_forward.1} parent=1 // pred_check
      _
    $region39: #{lstm_model_forward.1} parent=1 // pred_check_branch
      %54 = sbr.rel (%p51) target = $region41
    $region40: #{lstm_model_forward.1} parent=1 // pred_region
      %s70 = sand.u32 1, 7
      %p71 = scmp.eq.s32.totalorder %s70, 0
      %p72 = pneg %p71
      // Predicated region
      $region53: #{lstm_model_forward.1} parent=40 // pred_check
        _
      $region54: #{lstm_model_forward.1} parent=40 // pred_check_branch
        %74 = sbr.rel (%p71) target = $region56
      $region55: #{lstm_model_forward.1} parent=40 // pred_region
        %s75 = sand.u32 1, 7
        %s76 = ssub.s32 1, %s75
        %s77 = scalar_lea.vmem %s49, %s76
        %s78 = ssub.s32 1, %s75
        %s79 = scalar_lea.vmem [#allocation2], %s78
        %s80 = sshll.u32 1, %s75
        %s81 = ssub.s32 %s80, 1
        loop: start=0, step=1, limit=1
        $region57: #{lstm_model_forward.1} parent=55 // loop_pre_header
          _
        $region58: #{lstm_model_forward.1} parent=55 // loop_header
          %s83 = sphi 0, %s87
          %p84 = scmp.ge.s32.totalorder %s83, 1
          %s88 = sphi %s77, %s77
          %s89 = sphi %s79, %s79
        $region59: #{lstm_model_forward.1} parent=55 // loop_header_branch
          %86 = sbr.rel (%p84) target = $region63
        $region60: #{lstm_model_forward.1} parent=55 // loop_body
          %v90 = vld [vmem:[%s88] sm:%s81]
          %91 = vst [vmem:[%s89] sm:%s81] %v90
        $region61: #{lstm_model_forward.1} parent=55 // loop_footer
          %s87 = sadd.s32 1, %s83
        $region62: #{lstm_model_forward.1} parent=55 // loop_footer_branch
          %82 = sbr.rel target = $region58
        $region63: #{lstm_model_forward.1} parent=55 // loop_exit
          _
      $region56: #{lstm_model_forward.1} parent=40 // pred_fallthru
        _
    $region41: #{lstm_model_forward.1} parent=1 // pred_fallthru
      _
    // Predicated region
    $region42: #{lstm_model_forward.1} parent=1 // pred_check
      %p55 = pneg %p51
    $region43: #{lstm_model_forward.1} parent=1 // pred_check_branch
      %57 = sbr.rel (%p55) target = $region45
    $region44: #{lstm_model_forward.1} parent=1 // pred_region
      %s58 = sshll.u32 1, 1
      %s59 = ssub.s32 %s58, 1
      loop: start=0, step=1, limit=1
      $region46: #{lstm_model_forward.1} parent=44 // loop_pre_header
        _
      $region47: #{lstm_model_forward.1} parent=44 // loop_header
        %s61 = sphi 0, %s65
        %p62 = scmp.ge.s32.totalorder %s61, 1
        %s66 = sphi %s49, %s49
        %s67 = sphi [#allocation2], [#allocation2]
      $region48: #{lstm_model_forward.1} parent=44 // loop_header_branch
        %64 = sbr.rel (%p62) target = $region52
      $region49: #{lstm_model_forward.1} parent=44 // loop_body
        %v68 = vld [vmem:[%s66] sm:%s59]
        %69 = vst [vmem:[%s67] sm:%s59] %v68
      $region50: #{lstm_model_forward.1} parent=44 // loop_footer
        %s65 = sadd.s32 1, %s61
      $region51: #{lstm_model_forward.1} parent=44 // loop_footer_branch
        %60 = sbr.rel target = $region47
      $region52: #{lstm_model_forward.1} parent=44 // loop_exit
        _
    $region45: #{lstm_model_forward.1} parent=1 // pred_fallthru
      _
    // Predicated region
    $region64: #{lstm_model_forward.1} parent=1 // pred_check
      _
    $region65: #{lstm_model_forward.1} parent=1 // pred_check_branch
      %94 = sbr.rel (0) target = $region67
    $region66: #{lstm_model_forward.1} parent=1 // pred_region
      %95 = vsyncadd [#allocation3], 16
    $region67: #{lstm_model_forward.1} parent=1 // pred_fallthru
      _
    %s96 = sld [smem:[#allocation4 + $0x1]]
    %s97 = scalar_lea.vmem %s1, %s96
    %s98 = scalar_lea.vmem [#allocation2], 1
    %s99 = scalar_lea.sflag [#allocation3], 1
    %p101 = scmp.lt.u32.totalorder 1, 8
    %p102 = pneg %p101
    // Predicated region
    $region68: #{lstm_model_forward.1} parent=1 // pred_check
      _
    $region69: #{lstm_model_forward.1} parent=1 // pred_check_branch
      %104 = sbr.rel (%p101) target = $region71
    $region70: #{lstm_model_forward.1} parent=1 // pred_region
      %s120 = sand.u32 1, 7
      %p121 = scmp.eq.s32.totalorder %s120, 0
      %p122 = pneg %p121
      // Predicated region
      $region83: #{lstm_model_forward.1} parent=70 // pred_check
        _
      $region84: #{lstm_model_forward.1} parent=70 // pred_check_branch
        %124 = sbr.rel (%p121) target = $region86
      $region85: #{lstm_model_forward.1} parent=70 // pred_region
        %s125 = sand.u32 1, 7
        %s126 = ssub.s32 1, %s125
        %s127 = scalar_lea.vmem %s97, %s126
        %s128 = ssub.s32 1, %s125
        %s129 = scalar_lea.vmem %s98, %s128 [#allocation2]
        %s130 = sshll.u32 1, %s125
        %s131 = ssub.s32 %s130, 1
        loop: start=0, step=1, limit=1
        $region87: #{lstm_model_forward.1} parent=85 // loop_pre_header
          _
        $region88: #{lstm_model_forward.1} parent=85 // loop_header
          %s133 = sphi 0, %s137
          %p134 = scmp.ge.s32.totalorder %s133, 1
          %s138 = sphi %s127, %s127
          %s139 = sphi %s129, %s129
        $region89: #{lstm_model_forward.1} parent=85 // loop_header_branch
          %136 = sbr.rel (%p134) target = $region93
        $region90: #{lstm_model_forward.1} parent=85 // loop_body
          %v140 = vld [vmem:[%s138] sm:%s131]
          %141 = vst [vmem:[%s139] sm:%s131] %v140
        $region91: #{lstm_model_forward.1} parent=85 // loop_footer
          %s137 = sadd.s32 1, %s133
        $region92: #{lstm_model_forward.1} parent=85 // loop_footer_branch
          %132 = sbr.rel target = $region88
        $region93: #{lstm_model_forward.1} parent=85 // loop_exit
          _
      $region86: #{lstm_model_forward.1} parent=70 // pred_fallthru
        _
    $region71: #{lstm_model_forward.1} parent=1 // pred_fallthru
      _
    // Predicated region
    $region72: #{lstm_model_forward.1} parent=1 // pred_check
      %p105 = pneg %p101
    $region73: #{lstm_model_forward.1} parent=1 // pred_check_branch
      %107 = sbr.rel (%p105) target = $region75
    $region74: #{lstm_model_forward.1} parent=1 // pred_region
      %s108 = sshll.u32 1, 1
      %s109 = ssub.s32 %s108, 1
      loop: start=0, step=1, limit=1
      $region76: #{lstm_model_forward.1} parent=74 // loop_pre_header
        _
      $region77: #{lstm_model_forward.1} parent=74 // loop_header
        %s111 = sphi 0, %s115
        %p112 = scmp.ge.s32.totalorder %s111, 1
        %s116 = sphi %s97, %s97
        %s117 = sphi %s98, %s98
      $region78: #{lstm_model_forward.1} parent=74 // loop_header_branch
        %114 = sbr.rel (%p112) target = $region82
      $region79: #{lstm_model_forward.1} parent=74 // loop_body
        %v118 = vld [vmem:[%s116] sm:%s109]
        %119 = vst [vmem:[%s117] sm:%s109] %v118
      $region80: #{lstm_model_forward.1} parent=74 // loop_footer
        %s115 = sadd.s32 1, %s111
      $region81: #{lstm_model_forward.1} parent=74 // loop_footer_branch
        %110 = sbr.rel target = $region77
      $region82: #{lstm_model_forward.1} parent=74 // loop_exit
        _
    $region75: #{lstm_model_forward.1} parent=1 // pred_fallthru
      _
    // Predicated region
    $region94: #{lstm_model_forward.1} parent=1 // pred_check
      _
    $region95: #{lstm_model_forward.1} parent=1 // pred_check_branch
      %144 = sbr.rel (0) target = $region97
    $region96: #{lstm_model_forward.1} parent=1 // pred_region
      %145 = vsyncadd %s99, 16
    $region97: #{lstm_model_forward.1} parent=1 // pred_fallthru
      _
    %s146 = sld [smem:[#allocation4 + $0x2]]
    %s147 = scalar_lea.vmem %s1, %s146
    %s148 = scalar_lea.vmem [#allocation2], 2
    %s149 = scalar_lea.sflag [#allocation3], 2
    %p151 = scmp.lt.u32.totalorder 1, 8
    %p152 = pneg %p151
    // Predicated region
    $region98: #{lstm_model_forward.1} parent=1 // pred_check
      _
    $region99: #{lstm_model_forward.1} parent=1 // pred_check_branch
      %154 = sbr.rel (%p151) target = $region101
    $region100: #{lstm_model_forward.1} parent=1 // pred_region
      %s170 = sand.u32 1, 7
      %p171 = scmp.eq.s32.totalorder %s170, 0
      %p172 = pneg %p171
      // Predicated region
      $region113: #{lstm_model_forward.1} parent=100 // pred_check
        _
      $region114: #{lstm_model_forward.1} parent=100 // pred_check_branch
        %174 = sbr.rel (%p171) target = $region116
      $region115: #{lstm_model_forward.1} parent=100 // pred_region
        %s175 = sand.u32 1, 7
        %s176 = ssub.s32 1, %s175
        %s177 = scalar_lea.vmem %s147, %s176
        %s178 = ssub.s32 1, %s175
        %s179 = scalar_lea.vmem %s148, %s178 [#allocation2]
        %s180 = sshll.u32 1, %s175
        %s181 = ssub.s32 %s180, 1
        loop: start=0, step=1, limit=1
        $region117: #{lstm_model_forward.1} parent=115 // loop_pre_header
          _
        $region118: #{lstm_model_forward.1} parent=115 // loop_header
          %s183 = sphi 0, %s187
          %p184 = scmp.ge.s32.totalorder %s183, 1
          %s188 = sphi %s177, %s177
          %s189 = sphi %s179, %s179
        $region119: #{lstm_model_forward.1} parent=115 // loop_header_branch
          %186 = sbr.rel (%p184) target = $region123
        $region120: #{lstm_model_forward.1} parent=115 // loop_body
          %v190 = vld [vmem:[%s188] sm:%s181]
          %191 = vst [vmem:[%s189] sm:%s181] %v190
        $region121: #{lstm_model_forward.1} parent=115 // loop_footer
          %s187 = sadd.s32 1, %s183
        $region122: #{lstm_model_forward.1} parent=115 // loop_footer_branch
          %182 = sbr.rel target = $region118
        $region123: #{lstm_model_forward.1} parent=115 // loop_exit
          _
      $region116: #{lstm_model_forward.1} parent=100 // pred_fallthru
        _
    $region101: #{lstm_model_forward.1} parent=1 // pred_fallthru
      _
    // Predicated region
    $region102: #{lstm_model_forward.1} parent=1 // pred_check
      %p155 = pneg %p151
    $region103: #{lstm_model_forward.1} parent=1 // pred_check_branch
      %157 = sbr.rel (%p155) target = $region105
    $region104: #{lstm_model_forward.1} parent=1 // pred_region
      %s158 = sshll.u32 1, 1
      %s159 = ssub.s32 %s158, 1
      loop: start=0, step=1, limit=1
      $region106: #{lstm_model_forward.1} parent=104 // loop_pre_header
        _
      $region107: #{lstm_model_forward.1} parent=104 // loop_header
        %s161 = sphi 0, %s165
        %p162 = scmp.ge.s32.totalorder %s161, 1
        %s166 = sphi %s147, %s147
        %s167 = sphi %s148, %s148
      $region108: #{lstm_model_forward.1} parent=104 // loop_header_branch
        %164 = sbr.rel (%p162) target = $region112
      $region109: #{lstm_model_forward.1} parent=104 // loop_body
        %v168 = vld [vmem:[%s166] sm:%s159]
        %169 = vst [vmem:[%s167] sm:%s159] %v168
      $region110: #{lstm_model_forward.1} parent=104 // loop_footer
        %s165 = sadd.s32 1, %s161
      $region111: #{lstm_model_forward.1} parent=104 // loop_footer_branch
        %160 = sbr.rel target = $region107
      $region112: #{lstm_model_forward.1} parent=104 // loop_exit
        _
    $region105: #{lstm_model_forward.1} parent=1 // pred_fallthru
      _
    // Predicated region
    $region124: #{lstm_model_forward.1} parent=1 // pred_check
      _
    $region125: #{lstm_model_forward.1} parent=1 // pred_check_branch
      %194 = sbr.rel (0) target = $region127
    $region126: #{lstm_model_forward.1} parent=1 // pred_region
      %195 = vsyncadd %s149, 16
    $region127: #{lstm_model_forward.1} parent=1 // pred_fallthru
      _
    %s196 = sld [smem:[#allocation4 + $0x3]]
    %s197 = scalar_lea.vmem %s1, %s196
    %s198 = scalar_lea.vmem [#allocation2], 3
    %s199 = scalar_lea.sflag [#allocation3], 3
    %p201 = scmp.lt.u32.totalorder 1, 8
    %p202 = pneg %p201
    // Predicated region
    $region128: #{lstm_model_forward.1} parent=1 // pred_check
      _
    $region129: #{lstm_model_forward.1} parent=1 // pred_check_branch
      %204 = sbr.rel (%p201) target = $region131
    $region130: #{lstm_model_forward.1} parent=1 // pred_region
      %s220 = sand.u32 1, 7
      %p221 = scmp.eq.s32.totalorder %s220, 0
      %p222 = pneg %p221
      // Predicated region
      $region143: #{lstm_model_forward.1} parent=130 // pred_check
        _
      $region144: #{lstm_model_forward.1} parent=130 // pred_check_branch
        %224 = sbr.rel (%p221) target = $region146
      $region145: #{lstm_model_forward.1} parent=130 // pred_region
        %s225 = sand.u32 1, 7
        %s226 = ssub.s32 1, %s225
        %s227 = scalar_lea.vmem %s197, %s226
        %s228 = ssub.s32 1, %s225
        %s229 = scalar_lea.vmem %s198, %s228 [#allocation2]
        %s230 = sshll.u32 1, %s225
        %s231 = ssub.s32 %s230, 1
        loop: start=0, step=1, limit=1
        $region147: #{lstm_model_forward.1} parent=145 // loop_pre_header
          _
        $region148: #{lstm_model_forward.1} parent=145 // loop_header
          %s233 = sphi 0, %s237
          %p234 = scmp.ge.s32.totalorder %s233, 1
          %s238 = sphi %s227, %s227
          %s239 = sphi %s229, %s229
        $region149: #{lstm_model_forward.1} parent=145 // loop_header_branch
          %236 = sbr.rel (%p234) target = $region153
        $region150: #{lstm_model_forward.1} parent=145 // loop_body
          %v240 = vld [vmem:[%s238] sm:%s231]
          %241 = vst [vmem:[%s239] sm:%s231] %v240
        $region151: #{lstm_model_forward.1} parent=145 // loop_footer
          %s237 = sadd.s32 1, %s233
        $region152: #{lstm_model_forward.1} parent=145 // loop_footer_branch
          %232 = sbr.rel target = $region148
        $region153: #{lstm_model_forward.1} parent=145 // loop_exit
          _
      $region146: #{lstm_model_forward.1} parent=130 // pred_fallthru
        _
    $region131: #{lstm_model_forward.1} parent=1 // pred_fallthru
      _
    // Predicated region
    $region132: #{lstm_model_forward.1} parent=1 // pred_check
      %p205 = pneg %p201
    $region133: #{lstm_model_forward.1} parent=1 // pred_check_branch
      %207 = sbr.rel (%p205) target = $region135
    $region134: #{lstm_model_forward.1} parent=1 // pred_region
      %s208 = sshll.u32 1, 1
      %s209 = ssub.s32 %s208, 1
      loop: start=0, step=1, limit=1
      $region136: #{lstm_model_forward.1} parent=134 // loop_pre_header
        _
      $region137: #{lstm_model_forward.1} parent=134 // loop_header
        %s211 = sphi 0, %s215
        %p212 = scmp.ge.s32.totalorder %s211, 1
        %s216 = sphi %s197, %s197
        %s217 = sphi %s198, %s198
      $region138: #{lstm_model_forward.1} parent=134 // loop_header_branch
        %214 = sbr.rel (%p212) target = $region142
      $region139: #{lstm_model_forward.1} parent=134 // loop_body
        %v218 = vld [vmem:[%s216] sm:%s209]
        %219 = vst [vmem:[%s217] sm:%s209] %v218
      $region140: #{lstm_model_forward.1} parent=134 // loop_footer
        %s215 = sadd.s32 1, %s211
      $region141: #{lstm_model_forward.1} parent=134 // loop_footer_branch
        %210 = sbr.rel target = $region137
      $region142: #{lstm_model_forward.1} parent=134 // loop_exit
        _
    $region135: #{lstm_model_forward.1} parent=1 // pred_fallthru
      _
    // Predicated region
    $region154: #{lstm_model_forward.1} parent=1 // pred_check
      _
    $region155: #{lstm_model_forward.1} parent=1 // pred_check_branch
      %244 = sbr.rel (0) target = $region157
    $region156: #{lstm_model_forward.1} parent=1 // pred_region
      %245 = vsyncadd %s199, 16
    $region157: #{lstm_model_forward.1} parent=1 // pred_fallthru
      _
    %s246 = sld [smem:[#allocation4 + $0x4]]
    %s247 = scalar_lea.vmem %s1, %s246
    %s248 = scalar_lea.vmem [#allocation2], 4
    %s249 = scalar_lea.sflag [#allocation3], 4
    %p251 = scmp.lt.u32.totalorder 1, 8
    %p252 = pneg %p251
    // Predicated region
    $region158: #{lstm_model_forward.1} parent=1 // pred_check
      _
    $region159: #{lstm_model_forward.1} parent=1 // pred_check_branch
      %254 = sbr.rel (%p251) target = $region161
    $region160: #{lstm_model_forward.1} parent=1 // pred_region
      %s270 = sand.u32 1, 7
      %p271 = scmp.eq.s32.totalorder %s270, 0
      %p272 = pneg %p271
      // Predicated region
      $region173: #{lstm_model_forward.1} parent=160 // pred_check
        _
      $region174: #{lstm_model_forward.1} parent=160 // pred_check_branch
        %274 = sbr.rel (%p271) target = $region176
      $region175: #{lstm_model_forward.1} parent=160 // pred_region
        %s275 = sand.u32 1, 7
        %s276 = ssub.s32 1, %s275
        %s277 = scalar_lea.vmem %s247, %s276
        %s278 = ssub.s32 1, %s275
        %s279 = scalar_lea.vmem %s248, %s278 [#allocation2]
        %s280 = sshll.u32 1, %s275
        %s281 = ssub.s32 %s280, 1
        loop: start=0, step=1, limit=1
        $region177: #{lstm_model_forward.1} parent=175 // loop_pre_header
          _
        $region178: #{lstm_model_forward.1} parent=175 // loop_header
          %s283 = sphi 0, %s287
          %p284 = scmp.ge.s32.totalorder %s283, 1
          %s288 = sphi %s277, %s277
          %s289 = sphi %s279, %s279
        $region179: #{lstm_model_forward.1} parent=175 // loop_header_branch
          %286 = sbr.rel (%p284) target = $region183
        $region180: #{lstm_model_forward.1} parent=175 // loop_body
          %v290 = vld [vmem:[%s288] sm:%s281]
          %291 = vst [vmem:[%s289] sm:%s281] %v290
        $region181: #{lstm_model_forward.1} parent=175 // loop_footer
          %s287 = sadd.s32 1, %s283
        $region182: #{lstm_model_forward.1} parent=175 // loop_footer_branch
          %282 = sbr.rel target = $region178
        $region183: #{lstm_model_forward.1} parent=175 // loop_exit
          _
      $region176: #{lstm_model_forward.1} parent=160 // pred_fallthru
        _
    $region161: #{lstm_model_forward.1} parent=1 // pred_fallthru
      _
    // Predicated region
    $region162: #{lstm_model_forward.1} parent=1 // pred_check
      %p255 = pneg %p251
    $region163: #{lstm_model_forward.1} parent=1 // pred_check_branch
      %257 = sbr.rel (%p255) target = $region165
    $region164: #{lstm_model_forward.1} parent=1 // pred_region
      %s258 = sshll.u32 1, 1
      %s259 = ssub.s32 %s258, 1
      loop: start=0, step=1, limit=1
      $region166: #{lstm_model_forward.1} parent=164 // loop_pre_header
        _
      $region167: #{lstm_model_forward.1} parent=164 // loop_header
        %s261 = sphi 0, %s265
        %p262 = scmp.ge.s32.totalorder %s261, 1
        %s266 = sphi %s247, %s247
        %s267 = sphi %s248, %s248
      $region168: #{lstm_model_forward.1} parent=164 // loop_header_branch
        %264 = sbr.rel (%p262) target = $region172
      $region169: #{lstm_model_forward.1} parent=164 // loop_body
        %v268 = vld [vmem:[%s266] sm:%s259]
        %269 = vst [vmem:[%s267] sm:%s259] %v268
      $region170: #{lstm_model_forward.1} parent=164 // loop_footer
        %s265 = sadd.s32 1, %s261
      $region171: #{lstm_model_forward.1} parent=164 // loop_footer_branch
        %260 = sbr.rel target = $region167
      $region172: #{lstm_model_forward.1} parent=164 // loop_exit
        _
    $region165: #{lstm_model_forward.1} parent=1 // pred_fallthru
      _
    // Predicated region
    $region184: #{lstm_model_forward.1} parent=1 // pred_check
      _
    $region185: #{lstm_model_forward.1} parent=1 // pred_check_branch
      %294 = sbr.rel (0) target = $region187
    $region186: #{lstm_model_forward.1} parent=1 // pred_region
      %295 = vsyncadd %s249, 16
    $region187: #{lstm_model_forward.1} parent=1 // pred_fallthru
      _
    %s296 = sld [smem:[#allocation4 + $0x5]]
    %s297 = scalar_lea.vmem %s1, %s296
    %s298 = scalar_lea.vmem [#allocation2], 5
    %s299 = scalar_lea.sflag [#allocation3], 5
    %p301 = scmp.lt.u32.totalorder 1, 8
    %p302 = pneg %p301
    // Predicated region
    $region188: #{lstm_model_forward.1} parent=1 // pred_check
      _
    $region189: #{lstm_model_forward.1} parent=1 // pred_check_branch
      %304 = sbr.rel (%p301) target = $region191
    $region190: #{lstm_model_forward.1} parent=1 // pred_region
      %s320 = sand.u32 1, 7
      %p321 = scmp.eq.s32.totalorder %s320, 0
      %p322 = pneg %p321
      // Predicated region
      $region203: #{lstm_model_forward.1} parent=190 // pred_check
        _
      $region204: #{lstm_model_forward.1} parent=190 // pred_check_branch
        %324 = sbr.rel (%p321) target = $region206
      $region205: #{lstm_model_forward.1} parent=190 // pred_region
        %s325 = sand.u32 1, 7
        %s326 = ssub.s32 1, %s325
        %s327 = scalar_lea.vmem %s297, %s326
        %s328 = ssub.s32 1, %s325
        %s329 = scalar_lea.vmem %s298, %s328 [#allocation2]
        %s330 = sshll.u32 1, %s325
        %s331 = ssub.s32 %s330, 1
        loop: start=0, step=1, limit=1
        $region207: #{lstm_model_forward.1} parent=205 // loop_pre_header
          _
        $region208: #{lstm_model_forward.1} parent=205 // loop_header
          %s333 = sphi 0, %s337
          %p334 = scmp.ge.s32.totalorder %s333, 1
          %s338 = sphi %s327, %s327
          %s339 = sphi %s329, %s329
        $region209: #{lstm_model_forward.1} parent=205 // loop_header_branch
          %336 = sbr.rel (%p334) target = $region213
        $region210: #{lstm_model_forward.1} parent=205 // loop_body
          %v340 = vld [vmem:[%s338] sm:%s331]
          %341 = vst [vmem:[%s339] sm:%s331] %v340
        $region211: #{lstm_model_forward.1} parent=205 // loop_footer
          %s337 = sadd.s32 1, %s333
        $region212: #{lstm_model_forward.1} parent=205 // loop_footer_branch
          %332 = sbr.rel target = $region208
        $region213: #{lstm_model_forward.1} parent=205 // loop_exit
          _
      $region206: #{lstm_model_forward.1} parent=190 // pred_fallthru
        _
    $region191: #{lstm_model_forward.1} parent=1 // pred_fallthru
      _
    // Predicated region
    $region192: #{lstm_model_forward.1} parent=1 // pred_check
      %p305 = pneg %p301
    $region193: #{lstm_model_forward.1} parent=1 // pred_check_branch
      %307 = sbr.rel (%p305) target = $region195
    $region194: #{lstm_model_forward.1} parent=1 // pred_region
      %s308 = sshll.u32 1, 1
      %s309 = ssub.s32 %s308, 1
      loop: start=0, step=1, limit=1
      $region196: #{lstm_model_forward.1} parent=194 // loop_pre_header
        _
      $region197: #{lstm_model_forward.1} parent=194 // loop_header
        %s311 = sphi 0, %s315
        %p312 = scmp.ge.s32.totalorder %s311, 1
        %s316 = sphi %s297, %s297
        %s317 = sphi %s298, %s298
      $region198: #{lstm_model_forward.1} parent=194 // loop_header_branch
        %314 = sbr.rel (%p312) target = $region202
      $region199: #{lstm_model_forward.1} parent=194 // loop_body
        %v318 = vld [vmem:[%s316] sm:%s309]
        %319 = vst [vmem:[%s317] sm:%s309] %v318
      $region200: #{lstm_model_forward.1} parent=194 // loop_footer
        %s315 = sadd.s32 1, %s311
      $region201: #{lstm_model_forward.1} parent=194 // loop_footer_branch
        %310 = sbr.rel target = $region197
      $region202: #{lstm_model_forward.1} parent=194 // loop_exit
        _
    $region195: #{lstm_model_forward.1} parent=1 // pred_fallthru
      _
    // Predicated region
    $region214: #{lstm_model_forward.1} parent=1 // pred_check
      _
    $region215: #{lstm_model_forward.1} parent=1 // pred_check_branch
      %344 = sbr.rel (0) target = $region217
    $region216: #{lstm_model_forward.1} parent=1 // pred_region
      %345 = vsyncadd %s299, 16
    $region217: #{lstm_model_forward.1} parent=1 // pred_fallthru
      _
    %s346 = sld [smem:[#allocation4 + $0x6]]
    %s347 = scalar_lea.vmem %s1, %s346
    %s348 = scalar_lea.vmem [#allocation2], 6
    %s349 = scalar_lea.sflag [#allocation3], 6
    %p351 = scmp.lt.u32.totalorder 1, 8
    %p352 = pneg %p351
    // Predicated region
    $region218: #{lstm_model_forward.1} parent=1 // pred_check
      _
    $region219: #{lstm_model_forward.1} parent=1 // pred_check_branch
      %354 = sbr.rel (%p351) target = $region221
    $region220: #{lstm_model_forward.1} parent=1 // pred_region
      %s370 = sand.u32 1, 7
      %p371 = scmp.eq.s32.totalorder %s370, 0
      %p372 = pneg %p371
      // Predicated region
      $region233: #{lstm_model_forward.1} parent=220 // pred_check
        _
      $region234: #{lstm_model_forward.1} parent=220 // pred_check_branch
        %374 = sbr.rel (%p371) target = $region236
      $region235: #{lstm_model_forward.1} parent=220 // pred_region
        %s375 = sand.u32 1, 7
        %s376 = ssub.s32 1, %s375
        %s377 = scalar_lea.vmem %s347, %s376
        %s378 = ssub.s32 1, %s375
        %s379 = scalar_lea.vmem %s348, %s378 [#allocation2]
        %s380 = sshll.u32 1, %s375
        %s381 = ssub.s32 %s380, 1
        loop: start=0, step=1, limit=1
        $region237: #{lstm_model_forward.1} parent=235 // loop_pre_header
          _
        $region238: #{lstm_model_forward.1} parent=235 // loop_header
          %s383 = sphi 0, %s387
          %p384 = scmp.ge.s32.totalorder %s383, 1
          %s388 = sphi %s377, %s377
          %s389 = sphi %s379, %s379
        $region239: #{lstm_model_forward.1} parent=235 // loop_header_branch
          %386 = sbr.rel (%p384) target = $region243
        $region240: #{lstm_model_forward.1} parent=235 // loop_body
          %v390 = vld [vmem:[%s388] sm:%s381]
          %391 = vst [vmem:[%s389] sm:%s381] %v390
        $region241: #{lstm_model_forward.1} parent=235 // loop_footer
          %s387 = sadd.s32 1, %s383
        $region242: #{lstm_model_forward.1} parent=235 // loop_footer_branch
          %382 = sbr.rel target = $region238
        $region243: #{lstm_model_forward.1} parent=235 // loop_exit
          _
      $region236: #{lstm_model_forward.1} parent=220 // pred_fallthru
        _
    $region221: #{lstm_model_forward.1} parent=1 // pred_fallthru
      _
    // Predicated region
    $region222: #{lstm_model_forward.1} parent=1 // pred_check
      %p355 = pneg %p351
    $region223: #{lstm_model_forward.1} parent=1 // pred_check_branch
      %357 = sbr.rel (%p355) target = $region225
    $region224: #{lstm_model_forward.1} parent=1 // pred_region
      %s358 = sshll.u32 1, 1
      %s359 = ssub.s32 %s358, 1
      loop: start=0, step=1, limit=1
      $region226: #{lstm_model_forward.1} parent=224 // loop_pre_header
        _
      $region227: #{lstm_model_forward.1} parent=224 // loop_header
        %s361 = sphi 0, %s365
        %p362 = scmp.ge.s32.totalorder %s361, 1
        %s366 = sphi %s347, %s347
        %s367 = sphi %s348, %s348
      $region228: #{lstm_model_forward.1} parent=224 // loop_header_branch
        %364 = sbr.rel (%p362) target = $region232
      $region229: #{lstm_model_forward.1} parent=224 // loop_body
        %v368 = vld [vmem:[%s366] sm:%s359]
        %369 = vst [vmem:[%s367] sm:%s359] %v368
      $region230: #{lstm_model_forward.1} parent=224 // loop_footer
        %s365 = sadd.s32 1, %s361
      $region231: #{lstm_model_forward.1} parent=224 // loop_footer_branch
        %360 = sbr.rel target = $region227
      $region232: #{lstm_model_forward.1} parent=224 // loop_exit
        _
    $region225: #{lstm_model_forward.1} parent=1 // pred_fallthru
      _
    // Predicated region
    $region244: #{lstm_model_forward.1} parent=1 // pred_check
      _
    $region245: #{lstm_model_forward.1} parent=1 // pred_check_branch
      %394 = sbr.rel (0) target = $region247
    $region246: #{lstm_model_forward.1} parent=1 // pred_region
      %395 = vsyncadd %s349, 16
    $region247: #{lstm_model_forward.1} parent=1 // pred_fallthru
      _
    %s396 = sld [smem:[#allocation4 + $0x7]]
    %s397 = scalar_lea.vmem %s1, %s396
    %s398 = scalar_lea.vmem [#allocation2], 7
    %s399 = scalar_lea.sflag [#allocation3], 7
    %p401 = scmp.lt.u32.totalorder 1, 8
    %p402 = pneg %p401
    // Predicated region
    $region248: #{lstm_model_forward.1} parent=1 // pred_check
      _
    $region249: #{lstm_model_forward.1} parent=1 // pred_check_branch
      %404 = sbr.rel (%p401) target = $region251
    $region250: #{lstm_model_forward.1} parent=1 // pred_region
      %s420 = sand.u32 1, 7
      %p421 = scmp.eq.s32.totalorder %s420, 0
      %p422 = pneg %p421
      // Predicated region
      $region263: #{lstm_model_forward.1} parent=250 // pred_check
        _
      $region264: #{lstm_model_forward.1} parent=250 // pred_check_branch
        %424 = sbr.rel (%p421) target = $region266
      $region265: #{lstm_model_forward.1} parent=250 // pred_region
        %s425 = sand.u32 1, 7
        %s426 = ssub.s32 1, %s425
        %s427 = scalar_lea.vmem %s397, %s426
        %s428 = ssub.s32 1, %s425
        %s429 = scalar_lea.vmem %s398, %s428 [#allocation2]
        %s430 = sshll.u32 1, %s425
        %s431 = ssub.s32 %s430, 1
        loop: start=0, step=1, limit=1
        $region267: #{lstm_model_forward.1} parent=265 // loop_pre_header
          _
        $region268: #{lstm_model_forward.1} parent=265 // loop_header
          %s433 = sphi 0, %s437
          %p434 = scmp.ge.s32.totalorder %s433, 1
          %s438 = sphi %s427, %s427
          %s439 = sphi %s429, %s429
        $region269: #{lstm_model_forward.1} parent=265 // loop_header_branch
          %436 = sbr.rel (%p434) target = $region273
        $region270: #{lstm_model_forward.1} parent=265 // loop_body
          %v440 = vld [vmem:[%s438] sm:%s431]
          %441 = vst [vmem:[%s439] sm:%s431] %v440
        $region271: #{lstm_model_forward.1} parent=265 // loop_footer
          %s437 = sadd.s32 1, %s433
        $region272: #{lstm_model_forward.1} parent=265 // loop_footer_branch
          %432 = sbr.rel target = $region268
        $region273: #{lstm_model_forward.1} parent=265 // loop_exit
          _
      $region266: #{lstm_model_forward.1} parent=250 // pred_fallthru
        _
    $region251: #{lstm_model_forward.1} parent=1 // pred_fallthru
      _
    // Predicated region
    $region252: #{lstm_model_forward.1} parent=1 // pred_check
      %p405 = pneg %p401
    $region253: #{lstm_model_forward.1} parent=1 // pred_check_branch
      %407 = sbr.rel (%p405) target = $region255
    $region254: #{lstm_model_forward.1} parent=1 // pred_region
      %s408 = sshll.u32 1, 1
      %s409 = ssub.s32 %s408, 1
      loop: start=0, step=1, limit=1
      $region256: #{lstm_model_forward.1} parent=254 // loop_pre_header
        _
      $region257: #{lstm_model_forward.1} parent=254 // loop_header
        %s411 = sphi 0, %s415
        %p412 = scmp.ge.s32.totalorder %s411, 1
        %s416 = sphi %s397, %s397
        %s417 = sphi %s398, %s398
      $region258: #{lstm_model_forward.1} parent=254 // loop_header_branch
        %414 = sbr.rel (%p412) target = $region262
      $region259: #{lstm_model_forward.1} parent=254 // loop_body
        %v418 = vld [vmem:[%s416] sm:%s409]
        %419 = vst [vmem:[%s417] sm:%s409] %v418
      $region260: #{lstm_model_forward.1} parent=254 // loop_footer
        %s415 = sadd.s32 1, %s411
      $region261: #{lstm_model_forward.1} parent=254 // loop_footer_branch
        %410 = sbr.rel target = $region257
      $region262: #{lstm_model_forward.1} parent=254 // loop_exit
        _
    $region255: #{lstm_model_forward.1} parent=1 // pred_fallthru
      _
    // Predicated region
    $region274: #{lstm_model_forward.1} parent=1 // pred_check
      _
    $region275: #{lstm_model_forward.1} parent=1 // pred_check_branch
      %444 = sbr.rel (0) target = $region277
    $region276: #{lstm_model_forward.1} parent=1 // pred_region
      %445 = vsyncadd %s399, 16
    $region277: #{lstm_model_forward.1} parent=1 // pred_fallthru
      _
    %s446 = sld [smem:[#allocation4]]
    %s447 = smul.u32 1, 1
    %s448 = sshll.u32 %s447, 4
    %449 = dma.done [#allocation3], %s448
    %s450 = sld [smem:[#allocation4 + $0x1]]
    %s451 = sshll.u32 %s447, 4
    %452 = dma.done %s99, %s451
    %s453 = sld [smem:[#allocation4 + $0x2]]
    %s454 = sshll.u32 %s447, 4
    %455 = dma.done %s149, %s454
    %s456 = sld [smem:[#allocation4 + $0x3]]
    %s457 = sshll.u32 %s447, 4
    %458 = dma.done %s199, %s457
    %s459 = sld [smem:[#allocation4 + $0x4]]
    %s460 = sshll.u32 %s447, 4
    %461 = dma.done %s249, %s460
    %s462 = sld [smem:[#allocation4 + $0x5]]
    %s463 = sshll.u32 %s447, 4
    %464 = dma.done %s299, %s463
    %s465 = sld [smem:[#allocation4 + $0x6]]
    %s466 = sshll.u32 %s447, 4
    %467 = dma.done %s349, %s466
    %s468 = sld [smem:[#allocation4 + $0x7]]
    %s469 = sshll.u32 %s447, 4
    %470 = dma.done %s399, %s469
    %v471 = vld [vmem:[#allocation2] sm:$0xff]
    %v472 = vld [vmem:[%s2] sm:$0xff]
    %v473 = vld [vmem:[%s2 + $0x8] sm:$0xff]
    %v474 = vld [vmem:[%s2 + $0x10] sm:$0xff]
    %v475 = vld [vmem:[%s2 + $0x18] sm:$0xff]
    %v476 = vld [vmem:[%s4] sm:$0x1]
    %v478 = vlaneseq
    %v479 = vshrl.u32 %v478, 7
    %v480 = vsub.s32 0, %v479
    %v481 = vrot.slane %v476, %v480
    %vm483 = vcmask 261120
    %v485 = vsel %vm483, %v471, 0
    %487 = vmatprep.subr.mxu0 0.0
    %488 = vmatpush1.msra.mxu0 0.0
    %489 = vmatprep.subr.mxu0 0.0
    %490 = vmatpush1.msra.mxu0 0.0
    %491 = vmatprep.subr.mxu0 0.0
    %492 = vmatpush1.msra.mxu0 0.0
    %493 = vmatprep.subr.mxu0 0.0
    %494 = vmatpush1.msra.mxu0 0.0
    %495 = vmatprep.subr.mxu0 0.0
    %496 = vmatpush1.msra.mxu0 0.0
    %497 = vmatprep.subr.mxu0 0.0
    %498 = vmatpush1.msra.mxu0 0.0
    %499 = vmatprep.subr.mxu0 0.0
    %500 = vmatpush1.msra.mxu0 0.0
    %501 = vmatprep.subr.mxu0 0.0
    %502 = vmatpush1.msra.mxu0 0.0
    %503 = vmatprep.subr.mxu0 0.0
    %504 = vmatpush1.msra.mxu0 0.0
    %505 = vmatprep.subr.mxu0 0.0
    %506 = vmatpush1.msra.mxu0 0.0
    %507 = vmatprep.subr.mxu0 0.0
    %508 = vmatpush1.msra.mxu0 0.0
    %509 = vmatprep.subr.mxu0 0.0
    %510 = vmatpush1.msra.mxu0 0.0
    %511 = vmatprep.subr.mxu0 0.0
    %512 = vmatpush1.msra.mxu0 %v475
    %513 = vmatprep.subr.mxu0 0.0
    %514 = vmatpush1.msra.mxu0 %v474
    %515 = vmatprep.subr.mxu0 0.0
    %516 = vmatpush1.msra.mxu0 %v473
    %517 = vmatprep.subr.mxu0 0.0
    %518 = vmatpush1.msra.mxu0 %v472
    %519 = vmatprep.subr.mxu0 0.0
    %520 = vmatpush2.msra.mxu0 0.0
    %521 = vmatprep.subr.mxu0 0.0
    %522 = vmatpush2.msra.mxu0 0.0
    %523 = vmatprep.subr.mxu0 0.0
    %524 = vmatpush2.msra.mxu0 0.0
    %525 = vmatprep.subr.mxu0 0.0
    %526 = vmatpush2.msra.mxu0 0.0
    %527 = vmatprep.subr.mxu0 0.0
    %528 = vmatpush2.msra.mxu0 0.0
    %529 = vmatprep.subr.mxu0 0.0
    %530 = vmatpush2.msra.mxu0 0.0
    %531 = vmatprep.subr.mxu0 0.0
    %532 = vmatpush2.msra.mxu0 0.0
    %533 = vmatprep.subr.mxu0 0.0
    %534 = vmatpush2.msra.mxu0 0.0
    %535 = vmatprep.subr.mxu0 0.0
    %536 = vmatpush2.msra.mxu0 0.0
    %537 = vmatprep.subr.mxu0 0.0
    %538 = vmatpush2.msra.mxu0 0.0
    %539 = vmatprep.subr.mxu0 0.0
    %540 = vmatpush2.msra.mxu0 0.0
    %541 = vmatprep.subr.mxu0 0.0
    %542 = vmatpush2.msra.mxu0 0.0
    %543 = vmatprep.subr.mxu0 0.0
    %544 = vmatpush2.msra.mxu0 0.0
    %545 = vmatprep.subr.mxu0 0.0
    %546 = vmatpush2.msra.mxu0 0.0
    %547 = vmatprep.subr.mxu0 0.0
    %548 = vmatpush2.msra.mxu0 0.0
    %549 = vmatprep.subr.mxu0 0.0
    %550 = vmatpush2.msra.mxu0 0.0
    %551 = vmatprep.mubr.f32.mxu0 0.0
    %552 = vmatmul.mubr.f32.gmra.mxu0 %v485
    %v553 = vpop.f32.mrf.mxu0
    %v554 = vadd.f32 %v481, %v553
    %v555 = vpop.f32.mrf.mxu0
    %556 = vdwg.mxu0
    %v557 = vld [vmem:[%s3] sm:$0xff]
    %v558 = vld [vmem:[%s3 + $0x8] sm:$0xff]
    %v559 = vld [vmem:[%s3 + $0x10] sm:$0xff]
    %v560 = vld [vmem:[%s3 + $0x18] sm:$0xff]
    %v561 = vld [vmem:[%s7] sm:$0x1]
    %v562 = vld [vmem:[%s8] sm:$0x1]
    %v564 = vsel %vm483, %v561, 0
    %566 = vmatprep.subr.mxu0 0.0
    %567 = vmatpush1.msra.mxu0 0.0
    %568 = vmatprep.subr.mxu0 0.0
    %569 = vmatpush1.msra.mxu0 0.0
    %570 = vmatprep.subr.mxu0 0.0
    %571 = vmatpush1.msra.mxu0 0.0
    %572 = vmatprep.subr.mxu0 0.0
    %573 = vmatpush1.msra.mxu0 0.0
    %574 = vmatprep.subr.mxu0 0.0
    %575 = vmatpush1.msra.mxu0 0.0
    %576 = vmatprep.subr.mxu0 0.0
    %577 = vmatpush1.msra.mxu0 0.0
    %578 = vmatprep.subr.mxu0 0.0
    %579 = vmatpush1.msra.mxu0 0.0
    %580 = vmatprep.subr.mxu0 0.0
    %581 = vmatpush1.msra.mxu0 0.0
    %582 = vmatprep.subr.mxu0 0.0
    %583 = vmatpush1.msra.mxu0 0.0
    %584 = vmatprep.subr.mxu0 0.0
    %585 = vmatpush1.msra.mxu0 0.0
    %586 = vmatprep.subr.mxu0 0.0
    %587 = vmatpush1.msra.mxu0 0.0
    %588 = vmatprep.subr.mxu0 0.0
    %589 = vmatpush1.msra.mxu0 0.0
    %590 = vmatprep.subr.mxu0 0.0
    %591 = vmatpush1.msra.mxu0 %v560
    %592 = vmatprep.subr.mxu0 0.0
    %593 = vmatpush1.msra.mxu0 %v559
    %594 = vmatprep.subr.mxu0 0.0
    %595 = vmatpush1.msra.mxu0 %v558
    %596 = vmatprep.subr.mxu0 0.0
    %597 = vmatpush1.msra.mxu0 %v557
    %598 = vmatprep.subr.mxu0 0.0
    %599 = vmatpush2.msra.mxu0 0.0
    %600 = vmatprep.subr.mxu0 0.0
    %601 = vmatpush2.msra.mxu0 0.0
    %602 = vmatprep.subr.mxu0 0.0
    %603 = vmatpush2.msra.mxu0 0.0
    %604 = vmatprep.subr.mxu0 0.0
    %605 = vmatpush2.msra.mxu0 0.0
    %606 = vmatprep.subr.mxu0 0.0
    %607 = vmatpush2.msra.mxu0 0.0
    %608 = vmatprep.subr.mxu0 0.0
    %609 = vmatpush2.msra.mxu0 0.0
    %610 = vmatprep.subr.mxu0 0.0
    %611 = vmatpush2.msra.mxu0 0.0
    %612 = vmatprep.subr.mxu0 0.0
    %613 = vmatpush2.msra.mxu0 0.0
    %614 = vmatprep.subr.mxu0 0.0
    %615 = vmatpush2.msra.mxu0 0.0
    %616 = vmatprep.subr.mxu0 0.0
    %617 = vmatpush2.msra.mxu0 0.0
    %618 = vmatprep.subr.mxu0 0.0
    %619 = vmatpush2.msra.mxu0 0.0
    %620 = vmatprep.subr.mxu0 0.0
    %621 = vmatpush2.msra.mxu0 0.0
    %622 = vmatprep.subr.mxu0 0.0
    %623 = vmatpush2.msra.mxu0 0.0
    %624 = vmatprep.subr.mxu0 0.0
    %625 = vmatpush2.msra.mxu0 0.0
    %626 = vmatprep.subr.mxu0 0.0
    %627 = vmatpush2.msra.mxu0 0.0
    %628 = vmatprep.subr.mxu0 0.0
    %629 = vmatpush2.msra.mxu0 0.0
    %630 = vmatprep.mubr.f32.mxu0 0.0
    %631 = vmatmul.mubr.f32.gmra.mxu0 %v564
    %v632 = vpop.f32.mrf.mxu0
    %v633 = vadd.f32 0.0, %v632
    %v634 = vpop.f32.mrf.mxu0
    %635 = vdwg.mxu0
    %v636 = vadd.f32 %v554, %v633
    %v637 = vxor.u32 %v636, 2147483648
    %v638 = vmul.f32 %v637, 1.442695
    %v639 = vpow.pop %v638
    %v640 = vadd.f32 %v639, 1.0
    %v641 = vrcp.pop %v640
    %v642 = vmul.f32 1.0, %v641
    %v643 = vtanh.pop %v636
    %v645 = vlaneseq
    %v646 = vshrl.u32 %v645, 7
    %v647 = vsub.s32 0, %v646
    %v648 = vrot.slane %v562, %v647
    %649 = vrot.lane.b32.xlu0 %v648, 32
    %v650 = vpop.permute.xlu0 %649
    %v652 = vmul.f32 %v642, %v650
    %654 = vrot.lane.b32.xlu0 %v643, 64
    %v655 = vpop.permute.xlu0 %654
    %v657 = vmul.f32 %v642, %v655
    %659 = vrot.lane.b32.xlu0 %v657, 32
    %v660 = vpop.permute.xlu0 %659
    %v662 = vadd.f32 %v652, %v660
    %v663 = vtanh.pop %v662
    %665 = vrot.lane.b32.xlu0 %v663, 64
    %v666 = vpop.permute.xlu0 %665
    %v668 = vmul.f32 %v642, %v666
    %670 = vrot.lane.b32.xlu0 %v668, 32
    %v671 = vpop.permute.xlu0 %670
    %v672 = vsel %vm483, %v671, 0
    %674 = vmatprep.subr.mxu0 0.0
    %675 = vmatpush1.msra.mxu0 0.0
    %676 = vmatprep.subr.mxu0 0.0
    %677 = vmatpush1.msra.mxu0 0.0
    %678 = vmatprep.subr.mxu0 0.0
    %679 = vmatpush1.msra.mxu0 0.0
    %680 = vmatprep.subr.mxu0 0.0
    %681 = vmatpush1.msra.mxu0 0.0
    %682 = vmatprep.subr.mxu0 0.0
    %683 = vmatpush1.msra.mxu0 0.0
    %684 = vmatprep.subr.mxu0 0.0
    %685 = vmatpush1.msra.mxu0 0.0
    %686 = vmatprep.subr.mxu0 0.0
    %687 = vmatpush1.msra.mxu0 0.0
    %688 = vmatprep.subr.mxu0 0.0
    %689 = vmatpush1.msra.mxu0 0.0
    %690 = vmatprep.subr.mxu0 0.0
    %691 = vmatpush1.msra.mxu0 0.0
    %692 = vmatprep.subr.mxu0 0.0
    %693 = vmatpush1.msra.mxu0 0.0
    %694 = vmatprep.subr.mxu0 0.0
    %695 = vmatpush1.msra.mxu0 0.0
    %696 = vmatprep.subr.mxu0 0.0
    %697 = vmatpush1.msra.mxu0 0.0
    %698 = vmatprep.subr.mxu0 0.0
    %699 = vmatpush1.msra.mxu0 %v560
    %700 = vmatprep.subr.mxu0 0.0
    %701 = vmatpush1.msra.mxu0 %v559
    %702 = vmatprep.subr.mxu0 0.0
    %703 = vmatpush1.msra.mxu0 %v558
    %704 = vmatprep.subr.mxu0 0.0
    %705 = vmatpush1.msra.mxu0 %v557
    %706 = vmatprep.subr.mxu0 0.0
    %707 = vmatpush2.msra.mxu0 0.0
    %708 = vmatprep.subr.mxu0 0.0
    %709 = vmatpush2.msra.mxu0 0.0
    %710 = vmatprep.subr.mxu0 0.0
    %711 = vmatpush2.msra.mxu0 0.0
    %712 = vmatprep.subr.mxu0 0.0
    %713 = vmatpush2.msra.mxu0 0.0
    %714 = vmatprep.subr.mxu0 0.0
    %715 = vmatpush2.msra.mxu0 0.0
    %716 = vmatprep.subr.mxu0 0.0
    %717 = vmatpush2.msra.mxu0 0.0
    %718 = vmatprep.subr.mxu0 0.0
    %719 = vmatpush2.msra.mxu0 0.0
    %720 = vmatprep.subr.mxu0 0.0
    %721 = vmatpush2.msra.mxu0 0.0
    %722 = vmatprep.subr.mxu0 0.0
    %723 = vmatpush2.msra.mxu0 0.0
    %724 = vmatprep.subr.mxu0 0.0
    %725 = vmatpush2.msra.mxu0 0.0
    %726 = vmatprep.subr.mxu0 0.0
    %727 = vmatpush2.msra.mxu0 0.0
    %728 = vmatprep.subr.mxu0 0.0
    %729 = vmatpush2.msra.mxu0 0.0
    %730 = vmatprep.subr.mxu0 0.0
    %731 = vmatpush2.msra.mxu0 0.0
    %732 = vmatprep.subr.mxu0 0.0
    %733 = vmatpush2.msra.mxu0 0.0
    %734 = vmatprep.subr.mxu0 0.0
    %735 = vmatpush2.msra.mxu0 0.0
    %736 = vmatprep.subr.mxu0 0.0
    %737 = vmatpush2.msra.mxu0 0.0
    %738 = vmatprep.mubr.f32.mxu0 0.0
    %739 = vmatmul.mubr.f32.gmra.mxu0 %v672
    %v740 = vpop.f32.mrf.mxu0
    %v741 = vadd.f32 0.0, %v740
    %v742 = vpop.f32.mrf.mxu0
    %743 = vdwg.mxu0
    %v745 = vrot.slane %v741, 7
    %v747 = vadd.f32 %v554, %v745
    %v748 = vxor.u32 %v747, 2147483648
    %v749 = vmul.f32 %v748, 1.442695
    %v750 = vpow.pop %v749
    %v751 = vadd.f32 %v750, 1.0
    %v752 = vrcp.pop %v751
    %v753 = vmul.f32 1.0, %v752
    %v754 = vtanh.pop %v747
    %v756 = vrot.slane %v662, 7
    %v758 = vmul.f32 %v753, %v756
    %760 = vrot.lane.b32.xlu0 %v754, 64
    %v761 = vpop.permute.xlu0 %760
    %v763 = vmul.f32 %v753, %v761
    %765 = vrot.lane.b32.xlu0 %v763, 32
    %v766 = vpop.permute.xlu0 %765
    %v768 = vadd.f32 %v758, %v766
    %v769 = vtanh.pop %v768
    %771 = vrot.lane.b32.xlu0 %v769, 64
    %v772 = vpop.permute.xlu0 %771
    %v774 = vmul.f32 %v753, %v772
    %v776 = vrot.slane %v774, 1
    %777 = vrot.lane.b32.xlu0 %v776, 32
    %v778 = vpop.permute.xlu0 %777
    %v779 = vsel %vm483, %v778, 0
    %781 = vmatprep.subr.mxu0 0.0
    %782 = vmatpush1.msra.mxu0 0.0
    %783 = vmatprep.subr.mxu0 0.0
    %784 = vmatpush1.msra.mxu0 0.0
    %785 = vmatprep.subr.mxu0 0.0
    %786 = vmatpush1.msra.mxu0 0.0
    %787 = vmatprep.subr.mxu0 0.0
    %788 = vmatpush1.msra.mxu0 0.0
    %789 = vmatprep.subr.mxu0 0.0
    %790 = vmatpush1.msra.mxu0 0.0
    %791 = vmatprep.subr.mxu0 0.0
    %792 = vmatpush1.msra.mxu0 0.0
    %793 = vmatprep.subr.mxu0 0.0
    %794 = vmatpush1.msra.mxu0 0.0
    %795 = vmatprep.subr.mxu0 0.0
    %796 = vmatpush1.msra.mxu0 0.0
    %797 = vmatprep.subr.mxu0 0.0
    %798 = vmatpush1.msra.mxu0 0.0
    %799 = vmatprep.subr.mxu0 0.0
    %800 = vmatpush1.msra.mxu0 0.0
    %801 = vmatprep.subr.mxu0 0.0
    %802 = vmatpush1.msra.mxu0 0.0
    %803 = vmatprep.subr.mxu0 0.0
    %804 = vmatpush1.msra.mxu0 0.0
    %805 = vmatprep.subr.mxu0 0.0
    %806 = vmatpush1.msra.mxu0 %v560
    %807 = vmatprep.subr.mxu0 0.0
    %808 = vmatpush1.msra.mxu0 %v559
    %809 = vmatprep.subr.mxu0 0.0
    %810 = vmatpush1.msra.mxu0 %v558
    %811 = vmatprep.subr.mxu0 0.0
    %812 = vmatpush1.msra.mxu0 %v557
    %813 = vmatprep.subr.mxu0 0.0
    %814 = vmatpush2.msra.mxu0 0.0
    %815 = vmatprep.subr.mxu0 0.0
    %816 = vmatpush2.msra.mxu0 0.0
    %817 = vmatprep.subr.mxu0 0.0
    %818 = vmatpush2.msra.mxu0 0.0
    %819 = vmatprep.subr.mxu0 0.0
    %820 = vmatpush2.msra.mxu0 0.0
    %821 = vmatprep.subr.mxu0 0.0
    %822 = vmatpush2.msra.mxu0 0.0
    %823 = vmatprep.subr.mxu0 0.0
    %824 = vmatpush2.msra.mxu0 0.0
    %825 = vmatprep.subr.mxu0 0.0
    %826 = vmatpush2.msra.mxu0 0.0
    %827 = vmatprep.subr.mxu0 0.0
    %828 = vmatpush2.msra.mxu0 0.0
    %829 = vmatprep.subr.mxu0 0.0
    %830 = vmatpush2.msra.mxu0 0.0
    %831 = vmatprep.subr.mxu0 0.0
    %832 = vmatpush2.msra.mxu0 0.0
    %833 = vmatprep.subr.mxu0 0.0
    %834 = vmatpush2.msra.mxu0 0.0
    %835 = vmatprep.subr.mxu0 0.0
    %836 = vmatpush2.msra.mxu0 0.0
    %837 = vmatprep.subr.mxu0 0.0
    %838 = vmatpush2.msra.mxu0 0.0
    %839 = vmatprep.subr.mxu0 0.0
    %840 = vmatpush2.msra.mxu0 0.0
    %841 = vmatprep.subr.mxu0 0.0
    %842 = vmatpush2.msra.mxu0 0.0
    %843 = vmatprep.subr.mxu0 0.0
    %844 = vmatpush2.msra.mxu0 0.0
    %845 = vmatprep.mubr.f32.mxu0 0.0
    %846 = vmatmul.mubr.f32.gmra.mxu0 %v779
    %v847 = vpop.f32.mrf.mxu0
    %v848 = vadd.f32 0.0, %v847
    %v849 = vpop.f32.mrf.mxu0
    %850 = vdwg.mxu0
    %v852 = vrot.slane %v848, 6
    %v854 = vadd.f32 %v554, %v852
    %v855 = vxor.u32 %v854, 2147483648
    %v856 = vmul.f32 %v855, 1.442695
    %v857 = vpow.pop %v856
    %v858 = vadd.f32 %v857, 1.0
    %v859 = vrcp.pop %v858
    %v860 = vmul.f32 1.0, %v859
    %v861 = vtanh.pop %v854
    %v863 = vrot.slane %v768, 7
    %v865 = vmul.f32 %v860, %v863
    %867 = vrot.lane.b32.xlu0 %v861, 64
    %v868 = vpop.permute.xlu0 %867
    %v870 = vmul.f32 %v860, %v868
    %872 = vrot.lane.b32.xlu0 %v870, 32
    %v873 = vpop.permute.xlu0 %872
    %v875 = vadd.f32 %v865, %v873
    %v876 = vtanh.pop %v875
    %878 = vrot.lane.b32.xlu0 %v876, 64
    %v879 = vpop.permute.xlu0 %878
    %v881 = vmul.f32 %v860, %v879
    %v883 = vrot.slane %v881, 2
    %884 = vrot.lane.b32.xlu0 %v883, 32
    %v885 = vpop.permute.xlu0 %884
    %v886 = vsel %vm483, %v885, 0
    %888 = vmatprep.subr.mxu0 0.0
    %889 = vmatpush1.msra.mxu0 0.0
    %890 = vmatprep.subr.mxu0 0.0
    %891 = vmatpush1.msra.mxu0 0.0
    %892 = vmatprep.subr.mxu0 0.0
    %893 = vmatpush1.msra.mxu0 0.0
    %894 = vmatprep.subr.mxu0 0.0
    %895 = vmatpush1.msra.mxu0 0.0
    %896 = vmatprep.subr.mxu0 0.0
    %897 = vmatpush1.msra.mxu0 0.0
    %898 = vmatprep.subr.mxu0 0.0
    %899 = vmatpush1.msra.mxu0 0.0
    %900 = vmatprep.subr.mxu0 0.0
    %901 = vmatpush1.msra.mxu0 0.0
    %902 = vmatprep.subr.mxu0 0.0
    %903 = vmatpush1.msra.mxu0 0.0
    %904 = vmatprep.subr.mxu0 0.0
    %905 = vmatpush1.msra.mxu0 0.0
    %906 = vmatprep.subr.mxu0 0.0
    %907 = vmatpush1.msra.mxu0 0.0
    %908 = vmatprep.subr.mxu0 0.0
    %909 = vmatpush1.msra.mxu0 0.0
    %910 = vmatprep.subr.mxu0 0.0
    %911 = vmatpush1.msra.mxu0 0.0
    %912 = vmatprep.subr.mxu0 0.0
    %913 = vmatpush1.msra.mxu0 %v560
    %914 = vmatprep.subr.mxu0 0.0
    %915 = vmatpush1.msra.mxu0 %v559
    %916 = vmatprep.subr.mxu0 0.0
    %917 = vmatpush1.msra.mxu0 %v558
    %918 = vmatprep.subr.mxu0 0.0
    %919 = vmatpush1.msra.mxu0 %v557
    %920 = vmatprep.subr.mxu0 0.0
    %921 = vmatpush2.msra.mxu0 0.0
    %922 = vmatprep.subr.mxu0 0.0
    %923 = vmatpush2.msra.mxu0 0.0
    %924 = vmatprep.subr.mxu0 0.0
    %925 = vmatpush2.msra.mxu0 0.0
    %926 = vmatprep.subr.mxu0 0.0
    %927 = vmatpush2.msra.mxu0 0.0
    %928 = vmatprep.subr.mxu0 0.0
    %929 = vmatpush2.msra.mxu0 0.0
    %930 = vmatprep.subr.mxu0 0.0
    %931 = vmatpush2.msra.mxu0 0.0
    %932 = vmatprep.subr.mxu0 0.0
    %933 = vmatpush2.msra.mxu0 0.0
    %934 = vmatprep.subr.mxu0 0.0
    %935 = vmatpush2.msra.mxu0 0.0
    %936 = vmatprep.subr.mxu0 0.0
    %937 = vmatpush2.msra.mxu0 0.0
    %938 = vmatprep.subr.mxu0 0.0
    %939 = vmatpush2.msra.mxu0 0.0
    %940 = vmatprep.subr.mxu0 0.0
    %941 = vmatpush2.msra.mxu0 0.0
    %942 = vmatprep.subr.mxu0 0.0
    %943 = vmatpush2.msra.mxu0 0.0
    %944 = vmatprep.subr.mxu0 0.0
    %945 = vmatpush2.msra.mxu0 0.0
    %946 = vmatprep.subr.mxu0 0.0
    %947 = vmatpush2.msra.mxu0 0.0
    %948 = vmatprep.subr.mxu0 0.0
    %949 = vmatpush2.msra.mxu0 0.0
    %950 = vmatprep.subr.mxu0 0.0
    %951 = vmatpush2.msra.mxu0 0.0
    %952 = vmatprep.mubr.f32.mxu0 0.0
    %953 = vmatmul.mubr.f32.gmra.mxu0 %v886
    %v954 = vpop.f32.mrf.mxu0
    %v955 = vadd.f32 0.0, %v954
    %v956 = vpop.f32.mrf.mxu0
    %957 = vdwg.mxu0
    %v959 = vrot.slane %v955, 5
    %v961 = vadd.f32 %v554, %v959
    %v962 = vxor.u32 %v961, 2147483648
    %v963 = vmul.f32 %v962, 1.442695
    %v964 = vpow.pop %v963
    %v965 = vadd.f32 %v964, 1.0
    %v966 = vrcp.pop %v965
    %v967 = vmul.f32 1.0, %v966
    %v968 = vtanh.pop %v961
    %v970 = vrot.slane %v875, 7
    %v972 = vmul.f32 %v967, %v970
    %974 = vrot.lane.b32.xlu0 %v968, 64
    %v975 = vpop.permute.xlu0 %974
    %v977 = vmul.f32 %v967, %v975
    %979 = vrot.lane.b32.xlu0 %v977, 32
    %v980 = vpop.permute.xlu0 %979
    %v982 = vadd.f32 %v972, %v980
    %v983 = vtanh.pop %v982
    %985 = vrot.lane.b32.xlu0 %v983, 64
    %v986 = vpop.permute.xlu0 %985
    %v988 = vmul.f32 %v967, %v986
    %v990 = vrot.slane %v988, 3
    %991 = vrot.lane.b32.xlu0 %v990, 32
    %v992 = vpop.permute.xlu0 %991
    %v993 = vsel %vm483, %v992, 0
    %995 = vmatprep.subr.mxu0 0.0
    %996 = vmatpush1.msra.mxu0 0.0
    %997 = vmatprep.subr.mxu0 0.0
    %998 = vmatpush1.msra.mxu0 0.0
    %999 = vmatprep.subr.mxu0 0.0
    %1000 = vmatpush1.msra.mxu0 0.0
    %1001 = vmatprep.subr.mxu0 0.0
    %1002 = vmatpush1.msra.mxu0 0.0
    %1003 = vmatprep.subr.mxu0 0.0
    %1004 = vmatpush1.msra.mxu0 0.0
    %1005 = vmatprep.subr.mxu0 0.0
    %1006 = vmatpush1.msra.mxu0 0.0
    %1007 = vmatprep.subr.mxu0 0.0
    %1008 = vmatpush1.msra.mxu0 0.0
    %1009 = vmatprep.subr.mxu0 0.0
    %1010 = vmatpush1.msra.mxu0 0.0
    %1011 = vmatprep.subr.mxu0 0.0
    %1012 = vmatpush1.msra.mxu0 0.0
    %1013 = vmatprep.subr.mxu0 0.0
    %1014 = vmatpush1.msra.mxu0 0.0
    %1015 = vmatprep.subr.mxu0 0.0
    %1016 = vmatpush1.msra.mxu0 0.0
    %1017 = vmatprep.subr.mxu0 0.0
    %1018 = vmatpush1.msra.mxu0 0.0
    %1019 = vmatprep.subr.mxu0 0.0
    %1020 = vmatpush1.msra.mxu0 %v560
    %1021 = vmatprep.subr.mxu0 0.0
    %1022 = vmatpush1.msra.mxu0 %v559
    %1023 = vmatprep.subr.mxu0 0.0
    %1024 = vmatpush1.msra.mxu0 %v558
    %1025 = vmatprep.subr.mxu0 0.0
    %1026 = vmatpush1.msra.mxu0 %v557
    %1027 = vmatprep.subr.mxu0 0.0
    %1028 = vmatpush2.msra.mxu0 0.0
    %1029 = vmatprep.subr.mxu0 0.0
    %1030 = vmatpush2.msra.mxu0 0.0
    %1031 = vmatprep.subr.mxu0 0.0
    %1032 = vmatpush2.msra.mxu0 0.0
    %1033 = vmatprep.subr.mxu0 0.0
    %1034 = vmatpush2.msra.mxu0 0.0
    %1035 = vmatprep.subr.mxu0 0.0
    %1036 = vmatpush2.msra.mxu0 0.0
    %1037 = vmatprep.subr.mxu0 0.0
    %1038 = vmatpush2.msra.mxu0 0.0
    %1039 = vmatprep.subr.mxu0 0.0
    %1040 = vmatpush2.msra.mxu0 0.0
    %1041 = vmatprep.subr.mxu0 0.0
    %1042 = vmatpush2.msra.mxu0 0.0
    %1043 = vmatprep.subr.mxu0 0.0
    %1044 = vmatpush2.msra.mxu0 0.0
    %1045 = vmatprep.subr.mxu0 0.0
    %1046 = vmatpush2.msra.mxu0 0.0
    %1047 = vmatprep.subr.mxu0 0.0
    %1048 = vmatpush2.msra.mxu0 0.0
    %1049 = vmatprep.subr.mxu0 0.0
    %1050 = vmatpush2.msra.mxu0 0.0
    %1051 = vmatprep.subr.mxu0 0.0
    %1052 = vmatpush2.msra.mxu0 0.0
    %1053 = vmatprep.subr.mxu0 0.0
    %1054 = vmatpush2.msra.mxu0 0.0
    %1055 = vmatprep.subr.mxu0 0.0
    %1056 = vmatpush2.msra.mxu0 0.0
    %1057 = vmatprep.subr.mxu0 0.0
    %1058 = vmatpush2.msra.mxu0 0.0
    %1059 = vmatprep.mubr.f32.mxu0 0.0
    %1060 = vmatmul.mubr.f32.gmra.mxu0 %v993
    %v1061 = vpop.f32.mrf.mxu0
    %v1062 = vadd.f32 0.0, %v1061
    %v1063 = vpop.f32.mrf.mxu0
    %1064 = vdwg.mxu0
    %v1066 = vrot.slane %v1062, 4
    %v1068 = vadd.f32 %v554, %v1066
    %v1069 = vxor.u32 %v1068, 2147483648
    %v1070 = vmul.f32 %v1069, 1.442695
    %v1071 = vpow.pop %v1070
    %v1072 = vadd.f32 %v1071, 1.0
    %v1073 = vrcp.pop %v1072
    %v1074 = vmul.f32 1.0, %v1073
    %v1075 = vtanh.pop %v1068
    %v1077 = vrot.slane %v982, 7
    %v1079 = vmul.f32 %v1074, %v1077
    %1081 = vrot.lane.b32.xlu0 %v1075, 64
    %v1082 = vpop.permute.xlu0 %1081
    %v1084 = vmul.f32 %v1074, %v1082
    %1086 = vrot.lane.b32.xlu0 %v1084, 32
    %v1087 = vpop.permute.xlu0 %1086
    %v1089 = vadd.f32 %v1079, %v1087
    %v1090 = vtanh.pop %v1089
    %1092 = vrot.lane.b32.xlu0 %v1090, 64
    %v1093 = vpop.permute.xlu0 %1092
    %v1095 = vmul.f32 %v1074, %v1093
    %v1097 = vrot.slane %v1095, 4
    %1098 = vrot.lane.b32.xlu0 %v1097, 32
    %v1099 = vpop.permute.xlu0 %1098
    %v1100 = vsel %vm483, %v1099, 0
    %1102 = vmatprep.subr.mxu0 0.0
    %1103 = vmatpush1.msra.mxu0 0.0
    %1104 = vmatprep.subr.mxu0 0.0
    %1105 = vmatpush1.msra.mxu0 0.0
    %1106 = vmatprep.subr.mxu0 0.0
    %1107 = vmatpush1.msra.mxu0 0.0
    %1108 = vmatprep.subr.mxu0 0.0
    %1109 = vmatpush1.msra.mxu0 0.0
    %1110 = vmatprep.subr.mxu0 0.0
    %1111 = vmatpush1.msra.mxu0 0.0
    %1112 = vmatprep.subr.mxu0 0.0
    %1113 = vmatpush1.msra.mxu0 0.0
    %1114 = vmatprep.subr.mxu0 0.0
    %1115 = vmatpush1.msra.mxu0 0.0
    %1116 = vmatprep.subr.mxu0 0.0
    %1117 = vmatpush1.msra.mxu0 0.0
    %1118 = vmatprep.subr.mxu0 0.0
    %1119 = vmatpush1.msra.mxu0 0.0
    %1120 = vmatprep.subr.mxu0 0.0
    %1121 = vmatpush1.msra.mxu0 0.0
    %1122 = vmatprep.subr.mxu0 0.0
    %1123 = vmatpush1.msra.mxu0 0.0
    %1124 = vmatprep.subr.mxu0 0.0
    %1125 = vmatpush1.msra.mxu0 0.0
    %1126 = vmatprep.subr.mxu0 0.0
    %1127 = vmatpush1.msra.mxu0 %v560
    %1128 = vmatprep.subr.mxu0 0.0
    %1129 = vmatpush1.msra.mxu0 %v559
    %1130 = vmatprep.subr.mxu0 0.0
    %1131 = vmatpush1.msra.mxu0 %v558
    %1132 = vmatprep.subr.mxu0 0.0
    %1133 = vmatpush1.msra.mxu0 %v557
    %1134 = vmatprep.subr.mxu0 0.0
    %1135 = vmatpush2.msra.mxu0 0.0
    %1136 = vmatprep.subr.mxu0 0.0
    %1137 = vmatpush2.msra.mxu0 0.0
    %1138 = vmatprep.subr.mxu0 0.0
    %1139 = vmatpush2.msra.mxu0 0.0
    %1140 = vmatprep.subr.mxu0 0.0
    %1141 = vmatpush2.msra.mxu0 0.0
    %1142 = vmatprep.subr.mxu0 0.0
    %1143 = vmatpush2.msra.mxu0 0.0
    %1144 = vmatprep.subr.mxu0 0.0
    %1145 = vmatpush2.msra.mxu0 0.0
    %1146 = vmatprep.subr.mxu0 0.0
    %1147 = vmatpush2.msra.mxu0 0.0
    %1148 = vmatprep.subr.mxu0 0.0
    %1149 = vmatpush2.msra.mxu0 0.0
    %1150 = vmatprep.subr.mxu0 0.0
    %1151 = vmatpush2.msra.mxu0 0.0
    %1152 = vmatprep.subr.mxu0 0.0
    %1153 = vmatpush2.msra.mxu0 0.0
    %1154 = vmatprep.subr.mxu0 0.0
    %1155 = vmatpush2.msra.mxu0 0.0
    %1156 = vmatprep.subr.mxu0 0.0
    %1157 = vmatpush2.msra.mxu0 0.0
    %1158 = vmatprep.subr.mxu0 0.0
    %1159 = vmatpush2.msra.mxu0 0.0
    %1160 = vmatprep.subr.mxu0 0.0
    %1161 = vmatpush2.msra.mxu0 0.0
    %1162 = vmatprep.subr.mxu0 0.0
    %1163 = vmatpush2.msra.mxu0 0.0
    %1164 = vmatprep.subr.mxu0 0.0
    %1165 = vmatpush2.msra.mxu0 0.0
    %1166 = vmatprep.mubr.f32.mxu0 0.0
    %1167 = vmatmul.mubr.f32.gmra.mxu0 %v1100
    %v1168 = vpop.f32.mrf.mxu0
    %v1169 = vadd.f32 0.0, %v1168
    %v1170 = vpop.f32.mrf.mxu0
    %1171 = vdwg.mxu0
    %v1173 = vrot.slane %v1169, 3
    %v1175 = vadd.f32 %v554, %v1173
    %v1176 = vxor.u32 %v1175, 2147483648
    %v1177 = vmul.f32 %v1176, 1.442695
    %v1178 = vpow.pop %v1177
    %v1179 = vadd.f32 %v1178, 1.0
    %v1180 = vrcp.pop %v1179
    %v1181 = vmul.f32 1.0, %v1180
    %v1182 = vtanh.pop %v1175
    %v1184 = vrot.slane %v1089, 7
    %v1186 = vmul.f32 %v1181, %v1184
    %1188 = vrot.lane.b32.xlu0 %v1182, 64
    %v1189 = vpop.permute.xlu0 %1188
    %v1191 = vmul.f32 %v1181, %v1189
    %1193 = vrot.lane.b32.xlu0 %v1191, 32
    %v1194 = vpop.permute.xlu0 %1193
    %v1196 = vadd.f32 %v1186, %v1194
    %v1197 = vtanh.pop %v1196
    %1199 = vrot.lane.b32.xlu0 %v1197, 64
    %v1200 = vpop.permute.xlu0 %1199
    %v1202 = vmul.f32 %v1181, %v1200
    %v1204 = vrot.slane %v1202, 5
    %1205 = vrot.lane.b32.xlu0 %v1204, 32
    %v1206 = vpop.permute.xlu0 %1205
    %v1207 = vsel %vm483, %v1206, 0
    %1209 = vmatprep.subr.mxu0 0.0
    %1210 = vmatpush1.msra.mxu0 0.0
    %1211 = vmatprep.subr.mxu0 0.0
    %1212 = vmatpush1.msra.mxu0 0.0
    %1213 = vmatprep.subr.mxu0 0.0
    %1214 = vmatpush1.msra.mxu0 0.0
    %1215 = vmatprep.subr.mxu0 0.0
    %1216 = vmatpush1.msra.mxu0 0.0
    %1217 = vmatprep.subr.mxu0 0.0
    %1218 = vmatpush1.msra.mxu0 0.0
    %1219 = vmatprep.subr.mxu0 0.0
    %1220 = vmatpush1.msra.mxu0 0.0
    %1221 = vmatprep.subr.mxu0 0.0
    %1222 = vmatpush1.msra.mxu0 0.0
    %1223 = vmatprep.subr.mxu0 0.0
    %1224 = vmatpush1.msra.mxu0 0.0
    %1225 = vmatprep.subr.mxu0 0.0
    %1226 = vmatpush1.msra.mxu0 0.0
    %1227 = vmatprep.subr.mxu0 0.0
    %1228 = vmatpush1.msra.mxu0 0.0
    %1229 = vmatprep.subr.mxu0 0.0
    %1230 = vmatpush1.msra.mxu0 0.0
    %1231 = vmatprep.subr.mxu0 0.0
    %1232 = vmatpush1.msra.mxu0 0.0
    %1233 = vmatprep.subr.mxu0 0.0
    %1234 = vmatpush1.msra.mxu0 %v560
    %1235 = vmatprep.subr.mxu0 0.0
    %1236 = vmatpush1.msra.mxu0 %v559
    %1237 = vmatprep.subr.mxu0 0.0
    %1238 = vmatpush1.msra.mxu0 %v558
    %1239 = vmatprep.subr.mxu0 0.0
    %1240 = vmatpush1.msra.mxu0 %v557
    %1241 = vmatprep.subr.mxu0 0.0
    %1242 = vmatpush2.msra.mxu0 0.0
    %1243 = vmatprep.subr.mxu0 0.0
    %1244 = vmatpush2.msra.mxu0 0.0
    %1245 = vmatprep.subr.mxu0 0.0
    %1246 = vmatpush2.msra.mxu0 0.0
    %1247 = vmatprep.subr.mxu0 0.0
    %1248 = vmatpush2.msra.mxu0 0.0
    %1249 = vmatprep.subr.mxu0 0.0
    %1250 = vmatpush2.msra.mxu0 0.0
    %1251 = vmatprep.subr.mxu0 0.0
    %1252 = vmatpush2.msra.mxu0 0.0
    %1253 = vmatprep.subr.mxu0 0.0
    %1254 = vmatpush2.msra.mxu0 0.0
    %1255 = vmatprep.subr.mxu0 0.0
    %1256 = vmatpush2.msra.mxu0 0.0
    %1257 = vmatprep.subr.mxu0 0.0
    %1258 = vmatpush2.msra.mxu0 0.0
    %1259 = vmatprep.subr.mxu0 0.0
    %1260 = vmatpush2.msra.mxu0 0.0
    %1261 = vmatprep.subr.mxu0 0.0
    %1262 = vmatpush2.msra.mxu0 0.0
    %1263 = vmatprep.subr.mxu0 0.0
    %1264 = vmatpush2.msra.mxu0 0.0
    %1265 = vmatprep.subr.mxu0 0.0
    %1266 = vmatpush2.msra.mxu0 0.0
    %1267 = vmatprep.subr.mxu0 0.0
    %1268 = vmatpush2.msra.mxu0 0.0
    %1269 = vmatprep.subr.mxu0 0.0
    %1270 = vmatpush2.msra.mxu0 0.0
    %1271 = vmatprep.subr.mxu0 0.0
    %1272 = vmatpush2.msra.mxu0 0.0
    %1273 = vmatprep.mubr.f32.mxu0 0.0
    %1274 = vmatmul.mubr.f32.gmra.mxu0 %v1207
    %v1275 = vpop.f32.mrf.mxu0
    %v1276 = vadd.f32 0.0, %v1275
    %v1277 = vpop.f32.mrf.mxu0
    %1278 = vdwg.mxu0
    %v1280 = vrot.slane %v1276, 2
    %v1282 = vadd.f32 %v554, %v1280
    %v1283 = vxor.u32 %v1282, 2147483648
    %v1284 = vmul.f32 %v1283, 1.442695
    %v1285 = vpow.pop %v1284
    %v1286 = vadd.f32 %v1285, 1.0
    %v1287 = vrcp.pop %v1286
    %v1288 = vmul.f32 1.0, %v1287
    %v1289 = vtanh.pop %v1282
    %v1291 = vrot.slane %v1196, 7
    %v1293 = vmul.f32 %v1288, %v1291
    %1295 = vrot.lane.b32.xlu0 %v1289, 64
    %v1296 = vpop.permute.xlu0 %1295
    %v1298 = vmul.f32 %v1288, %v1296
    %1300 = vrot.lane.b32.xlu0 %v1298, 32
    %v1301 = vpop.permute.xlu0 %1300
    %v1303 = vadd.f32 %v1293, %v1301
    %v1304 = vtanh.pop %v1303
    %1306 = vrot.lane.b32.xlu0 %v1304, 64
    %v1307 = vpop.permute.xlu0 %1306
    %v1309 = vmul.f32 %v1288, %v1307
    %v1311 = vrot.slane %v1309, 6
    %1312 = vrot.lane.b32.xlu0 %v1311, 32
    %v1313 = vpop.permute.xlu0 %1312
    %v1314 = vsel %vm483, %v1313, 0
    %1316 = vmatprep.subr.mxu0 0.0
    %1317 = vmatpush1.msra.mxu0 0.0
    %1318 = vmatprep.subr.mxu0 0.0
    %1319 = vmatpush1.msra.mxu0 0.0
    %1320 = vmatprep.subr.mxu0 0.0
    %1321 = vmatpush1.msra.mxu0 0.0
    %1322 = vmatprep.subr.mxu0 0.0
    %1323 = vmatpush1.msra.mxu0 0.0
    %1324 = vmatprep.subr.mxu0 0.0
    %1325 = vmatpush1.msra.mxu0 0.0
    %1326 = vmatprep.subr.mxu0 0.0
    %1327 = vmatpush1.msra.mxu0 0.0
    %1328 = vmatprep.subr.mxu0 0.0
    %1329 = vmatpush1.msra.mxu0 0.0
    %1330 = vmatprep.subr.mxu0 0.0
    %1331 = vmatpush1.msra.mxu0 0.0
    %1332 = vmatprep.subr.mxu0 0.0
    %1333 = vmatpush1.msra.mxu0 0.0
    %1334 = vmatprep.subr.mxu0 0.0
    %1335 = vmatpush1.msra.mxu0 0.0
    %1336 = vmatprep.subr.mxu0 0.0
    %1337 = vmatpush1.msra.mxu0 0.0
    %1338 = vmatprep.subr.mxu0 0.0
    %1339 = vmatpush1.msra.mxu0 0.0
    %1340 = vmatprep.subr.mxu0 0.0
    %1341 = vmatpush1.msra.mxu0 %v560
    %1342 = vmatprep.subr.mxu0 0.0
    %1343 = vmatpush1.msra.mxu0 %v559
    %1344 = vmatprep.subr.mxu0 0.0
    %1345 = vmatpush1.msra.mxu0 %v558
    %1346 = vmatprep.subr.mxu0 0.0
    %1347 = vmatpush1.msra.mxu0 %v557
    %1348 = vmatprep.subr.mxu0 0.0
    %1349 = vmatpush2.msra.mxu0 0.0
    %1350 = vmatprep.subr.mxu0 0.0
    %1351 = vmatpush2.msra.mxu0 0.0
    %1352 = vmatprep.subr.mxu0 0.0
    %1353 = vmatpush2.msra.mxu0 0.0
    %1354 = vmatprep.subr.mxu0 0.0
    %1355 = vmatpush2.msra.mxu0 0.0
    %1356 = vmatprep.subr.mxu0 0.0
    %1357 = vmatpush2.msra.mxu0 0.0
    %1358 = vmatprep.subr.mxu0 0.0
    %1359 = vmatpush2.msra.mxu0 0.0
    %1360 = vmatprep.subr.mxu0 0.0
    %1361 = vmatpush2.msra.mxu0 0.0
    %1362 = vmatprep.subr.mxu0 0.0
    %1363 = vmatpush2.msra.mxu0 0.0
    %1364 = vmatprep.subr.mxu0 0.0
    %1365 = vmatpush2.msra.mxu0 0.0
    %1366 = vmatprep.subr.mxu0 0.0
    %1367 = vmatpush2.msra.mxu0 0.0
    %1368 = vmatprep.subr.mxu0 0.0
    %1369 = vmatpush2.msra.mxu0 0.0
    %1370 = vmatprep.subr.mxu0 0.0
    %1371 = vmatpush2.msra.mxu0 0.0
    %1372 = vmatprep.subr.mxu0 0.0
    %1373 = vmatpush2.msra.mxu0 0.0
    %1374 = vmatprep.subr.mxu0 0.0
    %1375 = vmatpush2.msra.mxu0 0.0
    %1376 = vmatprep.subr.mxu0 0.0
    %1377 = vmatpush2.msra.mxu0 0.0
    %1378 = vmatprep.subr.mxu0 0.0
    %1379 = vmatpush2.msra.mxu0 0.0
    %1380 = vmatprep.mubr.f32.mxu0 0.0
    %1381 = vmatmul.mubr.f32.gmra.mxu0 %v1314
    %v1382 = vpop.f32.mrf.mxu0
    %v1383 = vadd.f32 0.0, %v1382
    %v1384 = vpop.f32.mrf.mxu0
    %1385 = vdwg.mxu0
    %v1387 = vrot.slane %v1383, 1
    %v1389 = vadd.f32 %v554, %v1387
    %v1390 = vxor.u32 %v1389, 2147483648
    %v1391 = vmul.f32 %v1390, 1.442695
    %v1392 = vpow.pop %v1391
    %v1393 = vadd.f32 %v1392, 1.0
    %v1394 = vrcp.pop %v1393
    %v1395 = vmul.f32 1.0, %v1394
    %v1396 = vtanh.pop %v1389
    %v1398 = vrot.slane %v1303, 7
    %v1400 = vmul.f32 %v1395, %v1398
    %1402 = vrot.lane.b32.xlu0 %v1396, 64
    %v1403 = vpop.permute.xlu0 %1402
    %v1405 = vmul.f32 %v1395, %v1403
    %1407 = vrot.lane.b32.xlu0 %v1405, 32
    %v1408 = vpop.permute.xlu0 %1407
    %v1410 = vadd.f32 %v1400, %v1408
    %v1411 = vtanh.pop %v1410
    %1413 = vrot.lane.b32.xlu0 %v1411, 64
    %v1414 = vpop.permute.xlu0 %1413
    %v1416 = vmul.f32 %v1395, %v1414
    %v1417 = vld [vmem:[%s5] sm:$0xff]
    %v1418 = vld [vmem:[%s5 + $0x8] sm:$0xff]
    %v1419 = vld [vmem:[%s5 + $0x10] sm:$0xff]
    %v1420 = vld [vmem:[%s5 + $0x18] sm:$0xff]
    %v1421 = vld [vmem:[%s6] sm:$0x1]
    %v1423 = vrot.slane %v1416, 7
    %1424 = vrot.lane.b32.xlu0 %v1423, 32
    %v1425 = vpop.permute.xlu0 %1424
    %v1426 = vsel %vm483, %v1425, 0
    %1428 = vmatprep.subr.mxu0 0.0
    %1429 = vmatpush1.msra.mxu0 0.0
    %1430 = vmatprep.subr.mxu0 0.0
    %1431 = vmatpush1.msra.mxu0 0.0
    %1432 = vmatprep.subr.mxu0 0.0
    %1433 = vmatpush1.msra.mxu0 0.0
    %1434 = vmatprep.subr.mxu0 0.0
    %1435 = vmatpush1.msra.mxu0 0.0
    %1436 = vmatprep.subr.mxu0 0.0
    %1437 = vmatpush1.msra.mxu0 0.0
    %1438 = vmatprep.subr.mxu0 0.0
    %1439 = vmatpush1.msra.mxu0 0.0
    %1440 = vmatprep.subr.mxu0 0.0
    %1441 = vmatpush1.msra.mxu0 0.0
    %1442 = vmatprep.subr.mxu0 0.0
    %1443 = vmatpush1.msra.mxu0 0.0
    %1444 = vmatprep.subr.mxu0 0.0
    %1445 = vmatpush1.msra.mxu0 0.0
    %1446 = vmatprep.subr.mxu0 0.0
    %1447 = vmatpush1.msra.mxu0 0.0
    %1448 = vmatprep.subr.mxu0 0.0
    %1449 = vmatpush1.msra.mxu0 0.0
    %1450 = vmatprep.subr.mxu0 0.0
    %1451 = vmatpush1.msra.mxu0 0.0
    %1452 = vmatprep.subr.mxu0 0.0
    %1453 = vmatpush1.msra.mxu0 %v1420
    %1454 = vmatprep.subr.mxu0 0.0
    %1455 = vmatpush1.msra.mxu0 %v1419
    %1456 = vmatprep.subr.mxu0 0.0
    %1457 = vmatpush1.msra.mxu0 %v1418
    %1458 = vmatprep.subr.mxu0 0.0
    %1459 = vmatpush1.msra.mxu0 %v1417
    %1460 = vmatprep.subr.mxu0 0.0
    %1461 = vmatpush2.msra.mxu0 0.0
    %1462 = vmatprep.subr.mxu0 0.0
    %1463 = vmatpush2.msra.mxu0 0.0
    %1464 = vmatprep.subr.mxu0 0.0
    %1465 = vmatpush2.msra.mxu0 0.0
    %1466 = vmatprep.subr.mxu0 0.0
    %1467 = vmatpush2.msra.mxu0 0.0
    %1468 = vmatprep.subr.mxu0 0.0
    %1469 = vmatpush2.msra.mxu0 0.0
    %1470 = vmatprep.subr.mxu0 0.0
    %1471 = vmatpush2.msra.mxu0 0.0
    %1472 = vmatprep.subr.mxu0 0.0
    %1473 = vmatpush2.msra.mxu0 0.0
    %1474 = vmatprep.subr.mxu0 0.0
    %1475 = vmatpush2.msra.mxu0 0.0
    %1476 = vmatprep.subr.mxu0 0.0
    %1477 = vmatpush2.msra.mxu0 0.0
    %1478 = vmatprep.subr.mxu0 0.0
    %1479 = vmatpush2.msra.mxu0 0.0
    %1480 = vmatprep.subr.mxu0 0.0
    %1481 = vmatpush2.msra.mxu0 0.0
    %1482 = vmatprep.subr.mxu0 0.0
    %1483 = vmatpush2.msra.mxu0 0.0
    %1484 = vmatprep.subr.mxu0 0.0
    %1485 = vmatpush2.msra.mxu0 0.0
    %1486 = vmatprep.subr.mxu0 0.0
    %1487 = vmatpush2.msra.mxu0 0.0
    %1488 = vmatprep.subr.mxu0 0.0
    %1489 = vmatpush2.msra.mxu0 0.0
    %1490 = vmatprep.subr.mxu0 0.0
    %1491 = vmatpush2.msra.mxu0 0.0
    %1492 = vmatprep.mubr.f32.mxu0 0.0
    %1493 = vmatmul.mubr.f32.gmra.mxu0 %v1426
    %v1494 = vpop.f32.mrf.mxu0
    %v1495 = vadd.f32 %v1421, %v1494
    %v1496 = vpop.f32.mrf.mxu0
    %1497 = vdwg.mxu0
    %vm1498 = vcmask 8192
    %v1499 = vsel %vm1498, %v1495, -inf
    %1500 = vmax.xlane.f32.xlu0 %v1499
    %v1501 = vpop.xlane.xlu0 %1500
    %v1502 = vsub.f32 %v1495, %v1501
    %v1503 = vmul.f32 %v1502, 1.442695
    %v1504 = vpow.pop %v1503
    %v1505 = vsel %vm1498, %v1504, 0.0
    %1506 = vadd.xlane.f32.xlu0 %v1505
    %v1507 = vpop.xlane.xlu0 %1506
    %v1508 = vlog2.pop %v1507
    %v1509 = vmul.f32 %v1508, 0.6931472
    %v1510 = vsub.f32 %v1502, %v1509
    %1511 = vst.msk [vmem:[#allocation7] sm:$0x1] %vm1498, %v1510
    %1512 = vrot.lane.b32.xlu0 %v1416, 32
    %v1513 = vpop.permute.xlu0 %1512
    %vm1515 = vcmask 261127
    %1516 = vst.msk [vmem:[#allocation8 - $0x7] sm:$0x80] %vm1515, %v1513
    %1518 = vrot.lane.b32.xlu0 %v1410, 96
    %v1519 = vpop.permute.xlu0 %1518
    %1521 = vst.msk [vmem:[#allocation10 - $0x7] sm:$0x80] %vm1515, %v1519
    // Predicated region
    $region278: #{lstm_model_forward.1} parent=1 // pred_check
      _
    $region279: #{lstm_model_forward.1} parent=1 // pred_check_branch
      %1523 = sbr.rel (0) target = $region281
    $region280: #{lstm_model_forward.1} parent=1 // pred_region
      %s1525 = ssub.s32 16, 16
      %1526 = vsyncadd [#allocation5], %s1525
      %s1528 = sshll.u32 [#allocation7], 4
      %s1529 = int_to_ptr.vmem [resolvable:$true] %s1528
      %1531 = dma.vmem_to_hbm [thread:$0]  %s1529, 16, %s9, [#allocation5]
    $region281: #{lstm_model_forward.1} parent=1 // pred_fallthru
      _
    // Predicated region
    $region282: #{lstm_model_forward.1} parent=1 // pred_check
      _
    $region283: #{lstm_model_forward.1} parent=1 // pred_check_branch
      %1533 = sbr.rel (0) target = $region285
    $region284: #{lstm_model_forward.1} parent=1 // pred_region
      %s1535 = ssub.s32 16, 16
      %1536 = vsyncadd [#allocation9], %s1535
      %s1538 = sshll.u32 [#allocation8], 4
      %s1539 = int_to_ptr.vmem [resolvable:$true] %s1538
      %1541 = dma.vmem_to_hbm [thread:$0]  %s1539, 16, %s10, [#allocation9]
    $region285: #{lstm_model_forward.1} parent=1 // pred_fallthru
      _
    // Predicated region
    $region286: #{lstm_model_forward.1} parent=1 // pred_check
      _
    $region287: #{lstm_model_forward.1} parent=1 // pred_check_branch
      %1543 = sbr.rel (0) target = $region289
    $region288: #{lstm_model_forward.1} parent=1 // pred_region
      %s1545 = ssub.s32 16, 16
      %1546 = vsyncadd [#allocation9], %s1545
      %s1548 = sshll.u32 [#allocation10], 4
      %s1549 = int_to_ptr.vmem [resolvable:$true] %s1548
      %1551 = dma.vmem_to_hbm [thread:$0]  %s1549, 16, %s11, [#allocation9]
    $region289: #{lstm_model_forward.1} parent=1 // pred_fallthru
      _
    // Predicated region
    $region290: #{lstm_model_forward.1} parent=1 // pred_check
      _
    $region291: #{lstm_model_forward.1} parent=1 // pred_check_branch
      %1553 = sbr.rel (0) target = $region293
    $region292: #{lstm_model_forward.1} parent=1 // pred_region
      %1554 = dma.done [#allocation5], 16
    $region293: #{lstm_model_forward.1} parent=1 // pred_fallthru
      _
    // Predicated region
    $region294: #{lstm_model_forward.1} parent=1 // pred_check
      _
    $region295: #{lstm_model_forward.1} parent=1 // pred_check_branch
      %1556 = sbr.rel (0) target = $region297
    $region296: #{lstm_model_forward.1} parent=1 // pred_region
      %1557 = dma.done [#allocation9], 16
    $region297: #{lstm_model_forward.1} parent=1 // pred_fallthru
      _
    // Predicated region
    $region298: #{lstm_model_forward.1} parent=1 // pred_check
      _
    $region299: #{lstm_model_forward.1} parent=1 // pred_check_branch
      %1559 = sbr.rel (0) target = $region301
    $region300: #{lstm_model_forward.1} parent=1 // pred_region
      %1560 = dma.done [#allocation9], 16
    $region301: #{lstm_model_forward.1} parent=1 // pred_fallthru
      _
    %1561 = vsyncpa [#allocation5], 1
    %1562 = vsyncpa [#allocation9], 1
    %1563 = vsyncpa [#allocation6], 1
  %1564 = vsyncmov [#allocation3]
  %s1565 = vpop.sfrf %1564
  %p1566 = scmp.eq.s32.totalorder %s1565, 0
  %p1567 = pneg %p1566
  %1569 = shalt.err (%p1567)
  %s1570 = scalar_lea.sflag [#allocation3], 1
  %1571 = vsyncmov %s1570
  %s1572 = vpop.sfrf %1571
  %p1573 = scmp.eq.s32.totalorder %s1572, 0
  %p1574 = pneg %p1573
  %1576 = shalt.err (%p1574)
  %s1577 = scalar_lea.sflag [#allocation3], 2
  %1578 = vsyncmov %s1577
  %s1579 = vpop.sfrf %1578
  %p1580 = scmp.eq.s32.totalorder %s1579, 0
  %p1581 = pneg %p1580
  %1583 = shalt.err (%p1581)
  %s1584 = scalar_lea.sflag [#allocation3], 3
  %1585 = vsyncmov %s1584
  %s1586 = vpop.sfrf %1585
  %p1587 = scmp.eq.s32.totalorder %s1586, 0
  %p1588 = pneg %p1587
  %1590 = shalt.err (%p1588)
  %s1591 = scalar_lea.sflag [#allocation3], 4
  %1592 = vsyncmov %s1591
  %s1593 = vpop.sfrf %1592
  %p1594 = scmp.eq.s32.totalorder %s1593, 0
  %p1595 = pneg %p1594
  %1597 = shalt.err (%p1595)
  %s1598 = scalar_lea.sflag [#allocation3], 5
  %1599 = vsyncmov %s1598
  %s1600 = vpop.sfrf %1599
  %p1601 = scmp.eq.s32.totalorder %s1600, 0
  %p1602 = pneg %p1601
  %1604 = shalt.err (%p1602)
  %s1605 = scalar_lea.sflag [#allocation3], 6
  %1606 = vsyncmov %s1605
  %s1607 = vpop.sfrf %1606
  %p1608 = scmp.eq.s32.totalorder %s1607, 0
  %p1609 = pneg %p1608
  %1611 = shalt.err (%p1609)
  %s1612 = scalar_lea.sflag [#allocation3], 7
  %1613 = vsyncmov %s1612
  %s1614 = vpop.sfrf %1613
  %p1615 = scmp.eq.s32.totalorder %s1614, 0
  %p1616 = pneg %p1615
  %1618 = shalt.err (%p1616)

</llo_original>
